<compile_context>
chip_gen: v7x
topology: tpu7x:2x2x1
jax: 0.10.0
libtpu: 0.0.40
codegen_flags: <defaults>
</compile_context>

<pallas_src>
import jax
import jax.numpy as jnp
from jax.experimental import pallas as pl
from jax.experimental.pallas import tpu as pltpu

H1, H2, H3, H4 = 512, 256, 128, 64  # 256*2, 256, 128, 64
_LANE = 128


def _round_up(n, m):
    return (n + m - 1) // m * m


def _mlp_kernel(x_ref,
                w1_ref, b1_ref,
                w2_ref, b2_ref,
                w3_ref, b3_ref,
                w4_ref, b4_ref,
                w5_ref, b5_ref,
                o_ref):
    # bf16 matmuls with f32 accumulation; bias add + ReLU in f32 on the VPU.
    def linear(h_bf16, w_ref, b_ref):
        return jnp.dot(h_bf16, w_ref[...],
                       preferred_element_type=jnp.float32) + b_ref[...]

    # Read f32 from HBM, cast to bf16 on the VPU (hidden under MXU time).
    h = x_ref[...].astype(jnp.bfloat16)
    h = jnp.maximum(linear(h, w1_ref, b1_ref), 0.0).astype(jnp.bfloat16)  # fc1+ReLU
    h = jnp.maximum(linear(h, w2_ref, b2_ref), 0.0).astype(jnp.bfloat16)  # fc2+ReLU
    h = jnp.maximum(linear(h, w3_ref, b3_ref), 0.0).astype(jnp.bfloat16)  # fc3+ReLU
    h = jnp.maximum(linear(h, w4_ref, b4_ref), 0.0).astype(jnp.bfloat16)  # fc4+ReLU
    o_ref[...] = linear(h, w5_ref, b5_ref).astype(o_ref.dtype)            # fc5


def prepare_params(params):
    """One-time conversion of PyTorch-style f32 params to kernel layout.

    w_i: (out, in) f32 -> (in_p, out_p) bf16   (transposed, lane-padded)
    b_i: (out,)    f32 -> (1, out_p)    f32
    Every layer's output width (and the next layer's input width) is padded
    to a multiple of 128 lanes with zeros.  Exact: padded weight columns and
    biases are 0, ReLU(0)=0, and the next layer's padded input rows are 0.
    """
    n_layers = 5
    out_dims = [int(params[f"w{i}"].shape[0]) for i in range(1, n_layers + 1)]
    in0 = int(params["w1"].shape[1])
    padded_out = [_round_up(d, _LANE) for d in out_dims]
    padded_in = [in0] + padded_out[:-1]

    prepped = {}
    for i in range(1, n_layers + 1):
        w = params[f"w{i}"].T.astype(jnp.float32)            # (in, out)
        b = params[f"b{i}"].reshape(1, -1).astype(jnp.float32)
        in_p, out_p = padded_in[i - 1], padded_out[i - 1]
        w = jnp.pad(w, ((0, in_p - w.shape[0]), (0, out_p - w.shape[1])))
        b = jnp.pad(b, ((0, 0), (0, out_p - b.shape[1])))
        prepped[f"w{i}"] = w.astype(jnp.bfloat16)
        prepped[f"b{i}"] = b
    prepped["out_dim"] = out_dims[-1]
    return prepped


def _select_batch_tile(B, batch_tile):
    if batch_tile is None:
        batch_tile = 2048 if B >= 8192 else 1024
    # Cap the tile so large batches give >= 2 parallel grid steps (keeps both
    # v7x TensorCores busy; harmless on single-TC v5e/v6e).
    bt = min(batch_tile, _round_up(pl.cdiv(B, 2), 256))
    bt = min(bt, _round_up(B, 16))      # never exceed the (16-aligned) batch
    bt = max(16, _round_up(bt, 16))     # >= 16 rows for bf16 sublane packing
    return bt


def nn_forward(x, prepped, *, batch_tile=None, slice_output=True):
    """x: [B, input_dim] f32 -> [B, output_dim] f32.

    With slice_output=False the lane-padded (Bp, 128) f32 buffer is returned
    directly (avoids an extra HBM pass when the consumer can slice lazily).
    """
    B, input_dim = x.shape
    out_dim = prepped["out_dim"]
    out_p = prepped["w5"].shape[1]                 # lane-padded output width

    bt = _select_batch_tile(B, batch_tile)
    Bp = _round_up(B, bt)
    xp = x if Bp == B else jnp.pad(x, ((0, Bp - B), (0, 0)))

    flat_params = []
    for i in range(1, 6):
        flat_params += [prepped[f"w{i}"], prepped[f"b{i}"]]

    vmem_limit = (48 if bt >= 2048 else 32) * 1024 * 1024

    def run(single_buffer_weights):
        in_specs = [pl.BlockSpec((bt, input_dim), lambda i: (i, 0))]
        for arr in flat_params:
            kw = {}
            if single_buffer_weights:
                # Constant index_map -> block never changes; single buffer.
                kw["pipeline_mode"] = pl.Buffered(1)
            in_specs.append(pl.BlockSpec(arr.shape, lambda i: (0, 0), **kw))
        return pl.pallas_call(
            _mlp_kernel,
            out_shape=jax.ShapeDtypeStruct((Bp, out_p), jnp.float32),
            grid=(Bp // bt,),
            in_specs=in_specs,
            out_specs=pl.BlockSpec((bt, out_p), lambda i: (i, 0)),
            compiler_params=pltpu.CompilerParams(
                dimension_semantics=("parallel",),
                vmem_limit_bytes=vmem_limit,
            ),
        )(xp, *flat_params)

    if hasattr(pl, "Buffered"):
        try:
            out = run(True)
        except Exception:  # pipeline_mode unsupported -> default double-buffer
            out = run(False)
    else:
        out = run(False)

    if not slice_output:
        return out
    return out[:B, :out_dim]


def init_params(key, input_dim, output_dim):
    """Deterministic PyTorch-shaped (out, in) f32 parameters."""
    dims = [(H1, input_dim), (H2, H1), (H3, H2), (H4, H3), (output_dim, H4)]
    params = {}
    for idx, (out_d, in_d) in enumerate(dims, start=1):
        key, kw, kb = jax.random.split(key, 3)
        bound = 1.0 / (in_d ** 0.5)   # mimic nn.Linear's uniform init range
        params[f"w{idx}"] = jax.random.uniform(
            kw, (out_d, in_d), jnp.float32, -bound, bound)
        params[f"b{idx}"] = jax.random.uniform(
            kb, (out_d,), jnp.float32, -bound, bound)
    return params


def reference_forward(x, params):
    h = x
    for i in range(1, 5):
        h = jnp.maximum(h @ params[f"w{i}"].T + params[f"b{i}"], 0.0)
    return h @ params["w5"].T + params["b5"]


if __name__ == "__main__":
    key = jax.random.PRNGKey(0)
    input_dim, output_dim = 32, 8

    key, kx, kp = jax.random.split(key, 3)
    params = init_params(kp, input_dim, output_dim)
    prepped = prepare_params(params)

    # Small single-tile case (default tile selection collapses to bt=16).
    x = jax.random.normal(kx, (16, input_dim), jnp.float32)
    out = jax.block_until_ready(nn_forward(x, prepped))
    ref = reference_forward(x, params)
    assert out.shape == (16, output_dim)
    assert jnp.allclose(out, ref, atol=5e-2, rtol=5e-2), "mismatch vs reference"

    # Multi-step grid path (batch padding + tiling) with a small override tile.
    key, kx2 = jax.random.split(key)
    x2 = jax.random.normal(kx2, (50, input_dim), jnp.float32)
    out2 = jax.block_until_ready(nn_forward(x2, prepped, batch_tile=16))
    ref2 = reference_forward(x2, params)
    assert out2.shape == (50, output_dim)
    assert jnp.allclose(out2, ref2, atol=5e-2, rtol=5e-2), "mismatch vs reference (tiled)"

    # Padded-output (lazy-slice) path.
    out3 = jax.block_until_ready(nn_forward(x2, prepped, slice_output=False))
    assert out3.shape[1] == 128
    assert jnp.allclose(out3[:50, :output_dim], ref2, atol=5e-2, rtol=5e-2), \
        "mismatch vs reference (padded output)"

    print("KERNEL_OK")
</pallas_src>

<mosaic_0001>
module attributes {stable_mosaic.version = 11 : i64} {
  func.func @_mlp_kernel(%arg0: i32, %arg1: memref<16x32xf32, #tpu.memory_space<vmem>>, %arg2: memref<32x512xbf16, #tpu.memory_space<vmem>>, %arg3: memref<1x512xf32, #tpu.memory_space<vmem>>, %arg4: memref<512x256xbf16, #tpu.memory_space<vmem>>, %arg5: memref<1x256xf32, #tpu.memory_space<vmem>>, %arg6: memref<256x128xbf16, #tpu.memory_space<vmem>>, %arg7: memref<1x128xf32, #tpu.memory_space<vmem>>, %arg8: memref<128x128xbf16, #tpu.memory_space<vmem>>, %arg9: memref<1x128xf32, #tpu.memory_space<vmem>>, %arg10: memref<128x128xbf16, #tpu.memory_space<vmem>>, %arg11: memref<1x128xf32, #tpu.memory_space<vmem>>, %arg12: memref<16x128xf32, #tpu.memory_space<vmem>>) attributes {dimension_semantics = [#tpu.dimension_semantics<parallel>], iteration_bounds = array<i64: 1>, scalar_prefetch = 0 : i64, scratch_operands = 0 : i64, tpu.core_type = #tpu.core_type<tc>, window_params = [{transform_indices = @transform_0, window_bounds = array<i64: 16, 32>}, {pipeline_mode = #tpu.pipeline_mode<synchronous>, transform_indices = @transform_1, window_bounds = array<i64: 32, 512>}, {pipeline_mode = #tpu.pipeline_mode<synchronous>, transform_indices = @transform_2, window_bounds = array<i64: 1, 512>}, {pipeline_mode = #tpu.pipeline_mode<synchronous>, transform_indices = @transform_3, window_bounds = array<i64: 512, 256>}, {pipeline_mode = #tpu.pipeline_mode<synchronous>, transform_indices = @transform_4, window_bounds = array<i64: 1, 256>}, {pipeline_mode = #tpu.pipeline_mode<synchronous>, transform_indices = @transform_5, window_bounds = array<i64: 256, 128>}, {pipeline_mode = #tpu.pipeline_mode<synchronous>, transform_indices = @transform_6, window_bounds = array<i64: 1, 128>}, {pipeline_mode = #tpu.pipeline_mode<synchronous>, transform_indices = @transform_7, window_bounds = array<i64: 128, 128>}, {pipeline_mode = #tpu.pipeline_mode<synchronous>, transform_indices = @transform_8, window_bounds = array<i64: 1, 128>}, {pipeline_mode = #tpu.pipeline_mode<synchronous>, transform_indices = @transform_9, window_bounds = array<i64: 128, 128>}, {pipeline_mode = #tpu.pipeline_mode<synchronous>, transform_indices = @transform_10, window_bounds = array<i64: 1, 128>}, {transform_indices = @transform_11, window_bounds = array<i64: 16, 128>}]} {
    %c0 = arith.constant 0 : index
    %c0_0 = arith.constant 0 : index
    %0 = vector.load %arg1[%c0, %c0_0] : memref<16x32xf32, #tpu.memory_space<vmem>>, vector<16x32xf32>
    %1 = arith.truncf %0 : vector<16x32xf32> to vector<16x32xbf16>
    %c0_1 = arith.constant 0 : index
    %c0_2 = arith.constant 0 : index
    %2 = vector.load %arg2[%c0_1, %c0_2] : memref<32x512xbf16, #tpu.memory_space<vmem>>, vector<32x512xbf16>
    %cst = arith.constant dense<0.000000e+00> : vector<16x512xf32>
    %3 = tpu.matmul %1, %2, %cst {dimension_numbers = #tpu.dot_dimension_numbers<[1], [0], [0], [1], [0, 0, 1, 1], [], []>} : vector<16x32xbf16>, vector<32x512xbf16>, vector<16x512xf32> -> vector<16x512xf32>
    %c0_3 = arith.constant 0 : index
    %c0_4 = arith.constant 0 : index
    %4 = vector.load %arg3[%c0_3, %c0_4] : memref<1x512xf32, #tpu.memory_space<vmem>>, vector<1x512xf32>
    %5 = vector.broadcast %4 : vector<1x512xf32> to vector<16x512xf32>
    %6 = arith.addf %3, %5 : vector<16x512xf32>
    %cst_5 = arith.constant 0.000000e+00 : f32
    %7 = vector.broadcast %cst_5 : f32 to vector<16x512xf32>
    %8 = arith.maximumf %6, %7 : vector<16x512xf32>
    %9 = arith.truncf %8 : vector<16x512xf32> to vector<16x512xbf16>
    %c0_6 = arith.constant 0 : index
    %c0_7 = arith.constant 0 : index
    %10 = vector.load %arg4[%c0_6, %c0_7] : memref<512x256xbf16, #tpu.memory_space<vmem>>, vector<512x256xbf16>
    %cst_8 = arith.constant dense<0.000000e+00> : vector<16x256xf32>
    %11 = tpu.matmul %9, %10, %cst_8 {dimension_numbers = #tpu.dot_dimension_numbers<[1], [0], [0], [1], [0, 0, 1, 1], [], []>} : vector<16x512xbf16>, vector<512x256xbf16>, vector<16x256xf32> -> vector<16x256xf32>
    %c0_9 = arith.constant 0 : index
    %c0_10 = arith.constant 0 : index
    %12 = vector.load %arg5[%c0_9, %c0_10] : memref<1x256xf32, #tpu.memory_space<vmem>>, vector<1x256xf32>
    %13 = vector.broadcast %12 : vector<1x256xf32> to vector<16x256xf32>
    %14 = arith.addf %11, %13 : vector<16x256xf32>
    %cst_11 = arith.constant 0.000000e+00 : f32
    %15 = vector.broadcast %cst_11 : f32 to vector<16x256xf32>
    %16 = arith.maximumf %14, %15 : vector<16x256xf32>
    %17 = arith.truncf %16 : vector<16x256xf32> to vector<16x256xbf16>
    %c0_12 = arith.constant 0 : index
    %c0_13 = arith.constant 0 : index
    %18 = vector.load %arg6[%c0_12, %c0_13] : memref<256x128xbf16, #tpu.memory_space<vmem>>, vector<256x128xbf16>
    %cst_14 = arith.constant dense<0.000000e+00> : vector<16x128xf32>
    %19 = tpu.matmul %17, %18, %cst_14 {dimension_numbers = #tpu.dot_dimension_numbers<[1], [0], [0], [1], [0, 0, 1, 1], [], []>} : vector<16x256xbf16>, vector<256x128xbf16>, vector<16x128xf32> -> vector<16x128xf32>
    %c0_15 = arith.constant 0 : index
    %c0_16 = arith.constant 0 : index
    %20 = vector.load %arg7[%c0_15, %c0_16] : memref<1x128xf32, #tpu.memory_space<vmem>>, vector<1x128xf32>
    %21 = vector.broadcast %20 : vector<1x128xf32> to vector<16x128xf32>
    %22 = arith.addf %19, %21 : vector<16x128xf32>
    %cst_17 = arith.constant 0.000000e+00 : f32
    %23 = vector.broadcast %cst_17 : f32 to vector<16x128xf32>
    %24 = arith.maximumf %22, %23 : vector<16x128xf32>
    %25 = arith.truncf %24 : vector<16x128xf32> to vector<16x128xbf16>
    %c0_18 = arith.constant 0 : index
    %c0_19 = arith.constant 0 : index
    %26 = vector.load %arg8[%c0_18, %c0_19] : memref<128x128xbf16, #tpu.memory_space<vmem>>, vector<128x128xbf16>
    %cst_20 = arith.constant dense<0.000000e+00> : vector<16x128xf32>
    %27 = tpu.matmul %25, %26, %cst_20 {dimension_numbers = #tpu.dot_dimension_numbers<[1], [0], [0], [1], [0, 0, 1, 1], [], []>} : vector<16x128xbf16>, vector<128x128xbf16>, vector<16x128xf32> -> vector<16x128xf32>
    %c0_21 = arith.constant 0 : index
    %c0_22 = arith.constant 0 : index
    %28 = vector.load %arg9[%c0_21, %c0_22] : memref<1x128xf32, #tpu.memory_space<vmem>>, vector<1x128xf32>
    %29 = vector.broadcast %28 : vector<1x128xf32> to vector<16x128xf32>
    %30 = arith.addf %27, %29 : vector<16x128xf32>
    %cst_23 = arith.constant 0.000000e+00 : f32
    %31 = vector.broadcast %cst_23 : f32 to vector<16x128xf32>
    %32 = arith.maximumf %30, %31 : vector<16x128xf32>
    %33 = arith.truncf %32 : vector<16x128xf32> to vector<16x128xbf16>
    %c0_24 = arith.constant 0 : index
    %c0_25 = arith.constant 0 : index
    %34 = vector.load %arg10[%c0_24, %c0_25] : memref<128x128xbf16, #tpu.memory_space<vmem>>, vector<128x128xbf16>
    %cst_26 = arith.constant dense<0.000000e+00> : vector<16x128xf32>
    %35 = tpu.matmul %33, %34, %cst_26 {dimension_numbers = #tpu.dot_dimension_numbers<[1], [0], [0], [1], [0, 0, 1, 1], [], []>} : vector<16x128xbf16>, vector<128x128xbf16>, vector<16x128xf32> -> vector<16x128xf32>
    %c0_27 = arith.constant 0 : index
    %c0_28 = arith.constant 0 : index
    %36 = vector.load %arg11[%c0_27, %c0_28] : memref<1x128xf32, #tpu.memory_space<vmem>>, vector<1x128xf32>
    %37 = vector.broadcast %36 : vector<1x128xf32> to vector<16x128xf32>
    %38 = arith.addf %35, %37 : vector<16x128xf32>
    %c0_29 = arith.constant 0 : index
    %c0_30 = arith.constant 0 : index
    %39 = vector.load %arg12[%c0_29, %c0_30] : memref<16x128xf32, #tpu.memory_space<vmem>>, vector<16x128xf32>
    tpu.vector_store %arg12[%c0_29, %c0_30], %38 {strides = array<i32>} : memref<16x128xf32, #tpu.memory_space<vmem>>, vector<16x128xf32>,
    return
  }
  func.func @transform_0(%arg0: i32) -> (i32, i32) {
    %c0_i32 = arith.constant 0 : i32
    %c0_i32_0 = arith.constant 0 : i32
    return %arg0, %c0_i32 : i32, i32
  }
  func.func @transform_1(%arg0: i32) -> (i32, i32) {
    %c0_i32 = arith.constant 0 : i32
    %c0_i32_0 = arith.constant 0 : i32
    %c0_i32_1 = arith.constant 0 : i32
    return %c0_i32, %c0_i32_0 : i32, i32
  }
  func.func @transform_2(%arg0: i32) -> (i32, i32) {
    %c0_i32 = arith.constant 0 : i32
    %c0_i32_0 = arith.constant 0 : i32
    %c0_i32_1 = arith.constant 0 : i32
    return %c0_i32, %c0_i32_0 : i32, i32
  }
  func.func @transform_3(%arg0: i32) -> (i32, i32) {
    %c0_i32 = arith.constant 0 : i32
    %c0_i32_0 = arith.constant 0 : i32
    %c0_i32_1 = arith.constant 0 : i32
    return %c0_i32, %c0_i32_0 : i32, i32
  }
  func.func @transform_4(%arg0: i32) -> (i32, i32) {
    %c0_i32 = arith.constant 0 : i32
    %c0_i32_0 = arith.constant 0 : i32
    %c0_i32_1 = arith.constant 0 : i32
    return %c0_i32, %c0_i32_0 : i32, i32
  }
  func.func @transform_5(%arg0: i32) -> (i32, i32) {
    %c0_i32 = arith.constant 0 : i32
    %c0_i32_0 = arith.constant 0 : i32
    %c0_i32_1 = arith.constant 0 : i32
    return %c0_i32, %c0_i32_0 : i32, i32
  }
  func.func @transform_6(%arg0: i32) -> (i32, i32) {
    %c0_i32 = arith.constant 0 : i32
    %c0_i32_0 = arith.constant 0 : i32
    %c0_i32_1 = arith.constant 0 : i32
    return %c0_i32, %c0_i32_0 : i32, i32
  }
  func.func @transform_7(%arg0: i32) -> (i32, i32) {
    %c0_i32 = arith.constant 0 : i32
    %c0_i32_0 = arith.constant 0 : i32
    %c0_i32_1 = arith.constant 0 : i32
    return %c0_i32, %c0_i32_0 : i32, i32
  }
  func.func @transform_8(%arg0: i32) -> (i32, i32) {
    %c0_i32 = arith.constant 0 : i32
    %c0_i32_0 = arith.constant 0 : i32
    %c0_i32_1 = arith.constant 0 : i32
    return %c0_i32, %c0_i32_0 : i32, i32
  }
  func.func @transform_9(%arg0: i32) -> (i32, i32) {
    %c0_i32 = arith.constant 0 : i32
    %c0_i32_0 = arith.constant 0 : i32
    %c0_i32_1 = arith.constant 0 : i32
    return %c0_i32, %c0_i32_0 : i32, i32
  }
  func.func @transform_10(%arg0: i32) -> (i32, i32) {
    %c0_i32 = arith.constant 0 : i32
    %c0_i32_0 = arith.constant 0 : i32
    %c0_i32_1 = arith.constant 0 : i32
    return %c0_i32, %c0_i32_0 : i32, i32
  }
  func.func @transform_11(%arg0: i32) -> (i32, i32) {
    %c0_i32 = arith.constant 0 : i32
    %c0_i32_0 = arith.constant 0 : i32
    return %arg0, %c0_i32 : i32, i32
  }
}

module attributes {stable_mosaic.version = 11 : i64} {
  func.func @_mlp_kernel(%arg0: i32, %arg1: memref<16x32xf32, #tpu.memory_space<vmem>>, %arg2: memref<32x512xbf16, #tpu.memory_space<vmem>>, %arg3: memref<1x512xf32, #tpu.memory_space<vmem>>, %arg4: memref<512x256xbf16, #tpu.memory_space<vmem>>, %arg5: memref<1x256xf32, #tpu.memory_space<vmem>>, %arg6: memref<256x128xbf16, #tpu.memory_space<vmem>>, %arg7: memref<1x128xf32, #tpu.memory_space<vmem>>, %arg8: memref<128x128xbf16, #tpu.memory_space<vmem>>, %arg9: memref<1x128xf32, #tpu.memory_space<vmem>>, %arg10: memref<128x128xbf16, #tpu.memory_space<vmem>>, %arg11: memref<1x128xf32, #tpu.memory_space<vmem>>, %arg12: memref<16x128xf32, #tpu.memory_space<vmem>>) attributes {dimension_semantics = [#tpu.dimension_semantics<parallel>], iteration_bounds = array<i64: 1>, scalar_prefetch = 0 : i64, scratch_operands = 0 : i64, tpu.core_type = #tpu.core_type<tc>, window_params = [{transform_indices = @transform_0, window_bounds = array<i64: 16, 32>}, {pipeline_mode = #tpu.pipeline_mode<synchronous>, transform_indices = @transform_1, window_bounds = array<i64: 32, 512>}, {pipeline_mode = #tpu.pipeline_mode<synchronous>, transform_indices = @transform_2, window_bounds = array<i64: 1, 512>}, {pipeline_mode = #tpu.pipeline_mode<synchronous>, transform_indices = @transform_3, window_bounds = array<i64: 512, 256>}, {pipeline_mode = #tpu.pipeline_mode<synchronous>, transform_indices = @transform_4, window_bounds = array<i64: 1, 256>}, {pipeline_mode = #tpu.pipeline_mode<synchronous>, transform_indices = @transform_5, window_bounds = array<i64: 256, 128>}, {pipeline_mode = #tpu.pipeline_mode<synchronous>, transform_indices = @transform_6, window_bounds = array<i64: 1, 128>}, {pipeline_mode = #tpu.pipeline_mode<synchronous>, transform_indices = @transform_7, window_bounds = array<i64: 128, 128>}, {pipeline_mode = #tpu.pipeline_mode<synchronous>, transform_indices = @transform_8, window_bounds = array<i64: 1, 128>}, {pipeline_mode = #tpu.pipeline_mode<synchronous>, transform_indices = @transform_9, window_bounds = array<i64: 128, 128>}, {pipeline_mode = #tpu.pipeline_mode<synchronous>, transform_indices = @transform_10, window_bounds = array<i64: 1, 128>}, {transform_indices = @transform_11, window_bounds = array<i64: 16, 128>}]} {
    %c0 = arith.constant 0 : index
    %c0_0 = arith.constant 0 : index
    %0 = vector.load %arg1[%c0, %c0_0] : memref<16x32xf32, #tpu.memory_space<vmem>>, vector<16x32xf32>
    %1 = arith.truncf %0 : vector<16x32xf32> to vector<16x32xbf16>
    %c0_1 = arith.constant 0 : index
    %c0_2 = arith.constant 0 : index
    %2 = vector.load %arg2[%c0_1, %c0_2] : memref<32x512xbf16, #tpu.memory_space<vmem>>, vector<32x512xbf16>
    %cst = arith.constant dense<0.000000e+00> : vector<16x512xf32>
    %3 = tpu.matmul %1, %2, %cst {dimension_numbers = #tpu.dot_dimension_numbers<[1], [0], [0], [1], [0, 0, 1, 1], [], []>} : vector<16x32xbf16>, vector<32x512xbf16>, vector<16x512xf32> -> vector<16x512xf32>
    %c0_3 = arith.constant 0 : index
    %c0_4 = arith.constant 0 : index
    %4 = vector.load %arg3[%c0_3, %c0_4] : memref<1x512xf32, #tpu.memory_space<vmem>>, vector<1x512xf32>
    %5 = vector.broadcast %4 : vector<1x512xf32> to vector<16x512xf32>
    %6 = arith.addf %3, %5 : vector<16x512xf32>
    %cst_5 = arith.constant 0.000000e+00 : f32
    %7 = vector.broadcast %cst_5 : f32 to vector<16x512xf32>
    %8 = arith.maximumf %6, %7 : vector<16x512xf32>
    %9 = arith.truncf %8 : vector<16x512xf32> to vector<16x512xbf16>
    %c0_6 = arith.constant 0 : index
    %c0_7 = arith.constant 0 : index
    %10 = vector.load %arg4[%c0_6, %c0_7] : memref<512x256xbf16, #tpu.memory_space<vmem>>, vector<512x256xbf16>
    %cst_8 = arith.constant dense<0.000000e+00> : vector<16x256xf32>
    %11 = tpu.matmul %9, %10, %cst_8 {dimension_numbers = #tpu.dot_dimension_numbers<[1], [0], [0], [1], [0, 0, 1, 1], [], []>} : vector<16x512xbf16>, vector<512x256xbf16>, vector<16x256xf32> -> vector<16x256xf32>
    %c0_9 = arith.constant 0 : index
    %c0_10 = arith.constant 0 : index
    %12 = vector.load %arg5[%c0_9, %c0_10] : memref<1x256xf32, #tpu.memory_space<vmem>>, vector<1x256xf32>
    %13 = vector.broadcast %12 : vector<1x256xf32> to vector<16x256xf32>
    %14 = arith.addf %11, %13 : vector<16x256xf32>
    %cst_11 = arith.constant 0.000000e+00 : f32
    %15 = vector.broadcast %cst_11 : f32 to vector<16x256xf32>
    %16 = arith.maximumf %14, %15 : vector<16x256xf32>
    %17 = arith.truncf %16 : vector<16x256xf32> to vector<16x256xbf16>
    %c0_12 = arith.constant 0 : index
    %c0_13 = arith.constant 0 : index
    %18 = vector.load %arg6[%c0_12, %c0_13] : memref<256x128xbf16, #tpu.memory_space<vmem>>, vector<256x128xbf16>
    %cst_14 = arith.constant dense<0.000000e+00> : vector<16x128xf32>
    %19 = tpu.matmul %17, %18, %cst_14 {dimension_numbers = #tpu.dot_dimension_numbers<[1], [0], [0], [1], [0, 0, 1, 1], [], []>} : vector<16x256xbf16>, vector<256x128xbf16>, vector<16x128xf32> -> vector<16x128xf32>
    %c0_15 = arith.constant 0 : index
    %c0_16 = arith.constant 0 : index
    %20 = vector.load %arg7[%c0_15, %c0_16] : memref<1x128xf32, #tpu.memory_space<vmem>>, vector<1x128xf32>
    %21 = vector.broadcast %20 : vector<1x128xf32> to vector<16x128xf32>
    %22 = arith.addf %19, %21 : vector<16x128xf32>
    %cst_17 = arith.constant 0.000000e+00 : f32
    %23 = vector.broadcast %cst_17 : f32 to vector<16x128xf32>
    %24 = arith.maximumf %22, %23 : vector<16x128xf32>
    %25 = arith.truncf %24 : vector<16x128xf32> to vector<16x128xbf16>
    %c0_18 = arith.constant 0 : index
    %c0_19 = arith.constant 0 : index
    %26 = vector.load %arg8[%c0_18, %c0_19] : memref<128x128xbf16, #tpu.memory_space<vmem>>, vector<128x128xbf16>
    %cst_20 = arith.constant dense<0.000000e+00> : vector<16x128xf32>
    %27 = tpu.matmul %25, %26, %cst_20 {dimension_numbers = #tpu.dot_dimension_numbers<[1], [0], [0], [1], [0, 0, 1, 1], [], []>} : vector<16x128xbf16>, vector<128x128xbf16>, vector<16x128xf32> -> vector<16x128xf32>
    %c0_21 = arith.constant 0 : index
    %c0_22 = arith.constant 0 : index
    %28 = vector.load %arg9[%c0_21, %c0_22] : memref<1x128xf32, #tpu.memory_space<vmem>>, vector<1x128xf32>
    %29 = vector.broadcast %28 : vector<1x128xf32> to vector<16x128xf32>
    %30 = arith.addf %27, %29 : vector<16x128xf32>
    %cst_23 = arith.constant 0.000000e+00 : f32
    %31 = vector.broadcast %cst_23 : f32 to vector<16x128xf32>
    %32 = arith.maximumf %30, %31 : vector<16x128xf32>
    %33 = arith.truncf %32 : vector<16x128xf32> to vector<16x128xbf16>
    %c0_24 = arith.constant 0 : index
    %c0_25 = arith.constant 0 : index
    %34 = vector.load %arg10[%c0_24, %c0_25] : memref<128x128xbf16, #tpu.memory_space<vmem>>, vector<128x128xbf16>
    %cst_26 = arith.constant dense<0.000000e+00> : vector<16x128xf32>
    %35 = tpu.matmul %33, %34, %cst_26 {dimension_numbers = #tpu.dot_dimension_numbers<[1], [0], [0], [1], [0, 0, 1, 1], [], []>} : vector<16x128xbf16>, vector<128x128xbf16>, vector<16x128xf32> -> vector<16x128xf32>
    %c0_27 = arith.constant 0 : index
    %c0_28 = arith.constant 0 : index
    %36 = vector.load %arg11[%c0_27, %c0_28] : memref<1x128xf32, #tpu.memory_space<vmem>>, vector<1x128xf32>
    %37 = vector.broadcast %36 : vector<1x128xf32> to vector<16x128xf32>
    %38 = arith.addf %35, %37 : vector<16x128xf32>
    %c0_29 = arith.constant 0 : index
    %c0_30 = arith.constant 0 : index
    %39 = vector.load %arg12[%c0_29, %c0_30] : memref<16x128xf32, #tpu.memory_space<vmem>>, vector<16x128xf32>
    tpu.vector_store %arg12[%c0_29, %c0_30], %38 {strides = array<i32>} : memref<16x128xf32, #tpu.memory_space<vmem>>, vector<16x128xf32>,
    return
  }
  func.func @transform_0(%arg0: i32) -> (i32, i32) {
    %c0_i32 = arith.constant 0 : i32
    %c0_i32_0 = arith.constant 0 : i32
    return %arg0, %c0_i32 : i32, i32
  }
  func.func @transform_1(%arg0: i32) -> (i32, i32) {
    %c0_i32 = arith.constant 0 : i32
    %c0_i32_0 = arith.constant 0 : i32
    %c0_i32_1 = arith.constant 0 : i32
    return %c0_i32, %c0_i32_0 : i32, i32
  }
  func.func @transform_2(%arg0: i32) -> (i32, i32) {
    %c0_i32 = arith.constant 0 : i32
    %c0_i32_0 = arith.constant 0 : i32
    %c0_i32_1 = arith.constant 0 : i32
    return %c0_i32, %c0_i32_0 : i32, i32
  }
  func.func @transform_3(%arg0: i32) -> (i32, i32) {
    %c0_i32 = arith.constant 0 : i32
    %c0_i32_0 = arith.constant 0 : i32
    %c0_i32_1 = arith.constant 0 : i32
    return %c0_i32, %c0_i32_0 : i32, i32
  }
  func.func @transform_4(%arg0: i32) -> (i32, i32) {
    %c0_i32 = arith.constant 0 : i32
    %c0_i32_0 = arith.constant 0 : i32
    %c0_i32_1 = arith.constant 0 : i32
    return %c0_i32, %c0_i32_0 : i32, i32
  }
  func.func @transform_5(%arg0: i32) -> (i32, i32) {
    %c0_i32 = arith.constant 0 : i32
    %c0_i32_0 = arith.constant 0 : i32
    %c0_i32_1 = arith.constant 0 : i32
    return %c0_i32, %c0_i32_0 : i32, i32
  }
  func.func @transform_6(%arg0: i32) -> (i32, i32) {
    %c0_i32 = arith.constant 0 : i32
    %c0_i32_0 = arith.constant 0 : i32
    %c0_i32_1 = arith.constant 0 : i32
    return %c0_i32, %c0_i32_0 : i32, i32
  }
  func.func @transform_7(%arg0: i32) -> (i32, i32) {
    %c0_i32 = arith.constant 0 : i32
    %c0_i32_0 = arith.constant 0 : i32
    %c0_i32_1 = arith.constant 0 : i32
    return %c0_i32, %c0_i32_0 : i32, i32
  }
  func.func @transform_8(%arg0: i32) -> (i32, i32) {
    %c0_i32 = arith.constant 0 : i32
    %c0_i32_0 = arith.constant 0 : i32
    %c0_i32_1 = arith.constant 0 : i32
    return %c0_i32, %c0_i32_0 : i32, i32
  }
  func.func @transform_9(%arg0: i32) -> (i32, i32) {
    %c0_i32 = arith.constant 0 : i32
    %c0_i32_0 = arith.constant 0 : i32
    %c0_i32_1 = arith.constant 0 : i32
    return %c0_i32, %c0_i32_0 : i32, i32
  }
  func.func @transform_10(%arg0: i32) -> (i32, i32) {
    %c0_i32 = arith.constant 0 : i32
    %c0_i32_0 = arith.constant 0 : i32
    %c0_i32_1 = arith.constant 0 : i32
    return %c0_i32, %c0_i32_0 : i32, i32
  }
  func.func @transform_11(%arg0: i32) -> (i32, i32) {
    %c0_i32 = arith.constant 0 : i32
    %c0_i32_0 = arith.constant 0 : i32
    return %arg0, %c0_i32 : i32, i32
  }
}

</mosaic_0001>

<llo_original>
// kernel: tpu_custom_call.1
$region0: #{tpu_custom_call.1}
  #allocation0 [shape = 'u32[]', space=smem, size = 0x4, offset = 0x4, fixed_abs, tag = 'smem constant byte address 0x4 - core index']
  #allocation1 [shape = 'u32[144,128]{1,0:T(1,128)}', space=vmem, size = 0x12000, scoped, tag = 'internal scratch']
  %s0 = inlined_call_operand.hbm [shape: f32[16,32], index: 0, kind: input, shape index: {}]
  %s1 = inlined_call_operand.hbm [shape: bf16[32,512], index: 1, kind: input, shape index: {}]
  %s2 = inlined_call_operand.vmem [shape: f32[1,512], index: 2, kind: input, shape index: {}]
  %s3 = inlined_call_operand.hbm [shape: bf16[512,256], index: 3, kind: input, shape index: {}]
  %s4 = inlined_call_operand.vmem [shape: f32[1,256], index: 4, kind: input, shape index: {}]
  %s5 = inlined_call_operand.hbm [shape: bf16[256,128], index: 5, kind: input, shape index: {}]
  %s6 = inlined_call_operand.vmem [shape: f32[1,128], index: 6, kind: input, shape index: {}]
  %s7 = inlined_call_operand.hbm [shape: bf16[128,128], index: 7, kind: input, shape index: {}]
  %s8 = inlined_call_operand.vmem [shape: f32[1,128], index: 8, kind: input, shape index: {}]
  %s9 = inlined_call_operand.hbm [shape: bf16[128,128], index: 9, kind: input, shape index: {}]
  %s10 = inlined_call_operand.vmem [shape: f32[1,128], index: 10, kind: input, shape index: {}]
  %s11 = inlined_call_operand.hbm [shape: f32[16,128], index: 11, kind: output, shape index: {}]
  %s12 = sld [smem:[#allocation0]]
  $region78: #{tpu_custom_call.1} parent=0
    _
  %s14 = ssub.s32 1, %s12
  %s15 = scalar_select 0, %s14, %s12
  $region1: #{tpu_custom_call.1} parent=0
    #allocation2 [shape = 'u8[8192]{0}', space=vmem, size = 0x2000, scoped, tag = 'input window, operand 0, single buffered']
    #allocation3 [shape = 's32[1]{0}', space=sflag, size = 0x4, scoped, tag = 'scoped memory for tpu_custom_call.1']
    #allocation4 [shape = 's32[1]{0}', space=sflag, size = 0x4, scoped, tag = 'scoped memory for tpu_custom_call.1']
    #allocation5 [shape = 'u8[32768]{0}', space=vmem, size = 0x8000, scoped, tag = 'input window, operand 1, single buffered']
    #allocation6 [shape = 's32[1]{0}', space=sflag, size = 0x4, scoped, tag = 'scoped memory for tpu_custom_call.1']
    #allocation7 [shape = 'u8[262144]{0}', space=vmem, size = 0x40000, scoped, tag = 'input window, operand 3, single buffered']
    #allocation8 [shape = 'u8[65536]{0}', space=vmem, size = 0x10000, scoped, tag = 'input window, operand 5, single buffered']
    #allocation9 [shape = 's32[1]{0}', space=sflag, size = 0x4, scoped, tag = 'scoped memory for tpu_custom_call.1']
    #allocation10 [shape = 'u8[32768]{0}', space=vmem, size = 0x8000, scoped, tag = 'input window, operand 7, single buffered']
    #allocation11 [shape = 'u8[32768]{0}', space=vmem, size = 0x8000, scoped, tag = 'input window, operand 9, single buffered']
    #allocation12 [shape = 's32[1]{0}', space=sflag, size = 0x4, scoped, tag = 'scoped memory for tpu_custom_call.1']
    #allocation13 [shape = 'u8[8192]{0}', space=vmem, size = 0x2000, scoped, tag = 'output window, operand 0, single buffered']
    %16 = vsyncpa [#allocation3], 0
    %17 = vsyncpa [#allocation6], 0
    %18 = vsyncpa [#allocation9], 0
    %19 = vsyncpa [#allocation12], 0
    %20 = vsyncpa [#allocation4], 0
    // Predicated region
    $region2: #{tpu_custom_call.1} parent=1 // pred_check
      _
    $region3: #{tpu_custom_call.1} parent=1 // pred_check_branch
      %22 = sbr.rel (0) target = $region5
    $region4: #{tpu_custom_call.1} parent=1 // pred_region
      %s24 = ssub.s32 256, 256
      %25 = vsyncadd [#allocation3], %s24
      %s26 = sshll.u32 [#allocation2], 4
      %s27 = int_to_ptr.vmem [resolvable:$true] %s26
      %32 = dma.hbm_to_vmem [thread:$0]  %s0, 256, %s27, [#allocation3], 128, 128, 8
    $region5: #{tpu_custom_call.1} parent=1 // pred_fallthru
      _
    // Predicated region
    $region6: #{tpu_custom_call.1} parent=1 // pred_check
      _
    $region7: #{tpu_custom_call.1} parent=1 // pred_check_branch
      %34 = sbr.rel (0) target = $region9
    $region8: #{tpu_custom_call.1} parent=1 // pred_region
      %s36 = ssub.s32 1024, 1024
      %37 = vsyncadd [#allocation6], %s36
      %s38 = sshll.u32 [#allocation5], 4
      %s39 = int_to_ptr.vmem [resolvable:$true] %s38
      %44 = dma.hbm_to_vmem [thread:$0]  %s1, 1024, %s39, [#allocation6], 256, 256, 16
    $region9: #{tpu_custom_call.1} parent=1 // pred_fallthru
      _
    // Predicated region
    $region10: #{tpu_custom_call.1} parent=1 // pred_check
      _
    $region11: #{tpu_custom_call.1} parent=1 // pred_check_branch
      %46 = sbr.rel (0) target = $region13
    $region12: #{tpu_custom_call.1} parent=1 // pred_region
      _
    $region13: #{tpu_custom_call.1} parent=1 // pred_fallthru
      _
    // Predicated region
    $region14: #{tpu_custom_call.1} parent=1 // pred_check
      _
    $region15: #{tpu_custom_call.1} parent=1 // pred_check_branch
      %48 = sbr.rel (0) target = $region17
    $region16: #{tpu_custom_call.1} parent=1 // pred_region
      %s50 = ssub.s32 8192, 8192
      %51 = vsyncadd [#allocation6], %s50
      %s52 = sshll.u32 [#allocation7], 4
      %s53 = int_to_ptr.vmem [resolvable:$true] %s52
      %58 = dma.hbm_to_vmem [thread:$0]  %s3, 8192, %s53, [#allocation6], 128, 128, 8
    $region17: #{tpu_custom_call.1} parent=1 // pred_fallthru
      _
    // Predicated region
    $region18: #{tpu_custom_call.1} parent=1 // pred_check
      _
    $region19: #{tpu_custom_call.1} parent=1 // pred_check_branch
      %60 = sbr.rel (0) target = $region21
    $region20: #{tpu_custom_call.1} parent=1 // pred_region
      _
    $region21: #{tpu_custom_call.1} parent=1 // pred_fallthru
      _
    // Predicated region
    $region22: #{tpu_custom_call.1} parent=1 // pred_check
      _
    $region23: #{tpu_custom_call.1} parent=1 // pred_check_branch
      %62 = sbr.rel (0) target = $region25
    $region24: #{tpu_custom_call.1} parent=1 // pred_region
      %s64 = ssub.s32 2048, 2048
      %65 = vsyncadd [#allocation9], %s64
      %s66 = sshll.u32 [#allocation8], 4
      %s67 = int_to_ptr.vmem [resolvable:$true] %s66
      %72 = dma.hbm_to_vmem [thread:$0]  %s5, 2048, %s67, [#allocation9], 64, 64, 4
    $region25: #{tpu_custom_call.1} parent=1 // pred_fallthru
      _
    // Predicated region
    $region26: #{tpu_custom_call.1} parent=1 // pred_check
      _
    $region27: #{tpu_custom_call.1} parent=1 // pred_check_branch
      %74 = sbr.rel (0) target = $region29
    $region28: #{tpu_custom_call.1} parent=1 // pred_region
      _
    $region29: #{tpu_custom_call.1} parent=1 // pred_fallthru
      _
    // Predicated region
    $region30: #{tpu_custom_call.1} parent=1 // pred_check
      _
    $region31: #{tpu_custom_call.1} parent=1 // pred_check_branch
      %76 = sbr.rel (0) target = $region33
    $region32: #{tpu_custom_call.1} parent=1 // pred_region
      %s78 = ssub.s32 1024, 1024
      %79 = vsyncadd [#allocation9], %s78
      %s80 = sshll.u32 [#allocation10], 4
      %s81 = int_to_ptr.vmem [resolvable:$true] %s80
      %86 = dma.hbm_to_vmem [thread:$0]  %s7, 1024, %s81, [#allocation9], 64, 64, 4
    $region33: #{tpu_custom_call.1} parent=1 // pred_fallthru
      _
    // Predicated region
    $region34: #{tpu_custom_call.1} parent=1 // pred_check
      _
    $region35: #{tpu_custom_call.1} parent=1 // pred_check_branch
      %88 = sbr.rel (0) target = $region37
    $region36: #{tpu_custom_call.1} parent=1 // pred_region
      _
    $region37: #{tpu_custom_call.1} parent=1 // pred_fallthru
      _
    // Predicated region
    $region38: #{tpu_custom_call.1} parent=1 // pred_check
      _
    $region39: #{tpu_custom_call.1} parent=1 // pred_check_branch
      %90 = sbr.rel (0) target = $region41
    $region40: #{tpu_custom_call.1} parent=1 // pred_region
      %s92 = ssub.s32 1024, 1024
      %93 = vsyncadd [#allocation12], %s92
      %s94 = sshll.u32 [#allocation11], 4
      %s95 = int_to_ptr.vmem [resolvable:$true] %s94
      %100 = dma.hbm_to_vmem [thread:$0]  %s9, 1024, %s95, [#allocation12], 64, 64, 4
    $region41: #{tpu_custom_call.1} parent=1 // pred_fallthru
      _
    // Predicated region
    $region42: #{tpu_custom_call.1} parent=1 // pred_check
      _
    $region43: #{tpu_custom_call.1} parent=1 // pred_check_branch
      %102 = sbr.rel (0) target = $region45
    $region44: #{tpu_custom_call.1} parent=1 // pred_region
      _
    $region45: #{tpu_custom_call.1} parent=1 // pred_fallthru
      _
    // Predicated region
    $region46: #{tpu_custom_call.1} parent=1 // pred_check
      _
    $region47: #{tpu_custom_call.1} parent=1 // pred_check_branch
      %104 = sbr.rel (0) target = $region49
    $region48: #{tpu_custom_call.1} parent=1 // pred_region
      %105 = dma.done [#allocation3], 256
    $region49: #{tpu_custom_call.1} parent=1 // pred_fallthru
      _
    // Predicated region
    $region50: #{tpu_custom_call.1} parent=1 // pred_check
      _
    $region51: #{tpu_custom_call.1} parent=1 // pred_check_branch
      %107 = sbr.rel (0) target = $region53
    $region52: #{tpu_custom_call.1} parent=1 // pred_region
      %108 = dma.done [#allocation6], 1024
    $region53: #{tpu_custom_call.1} parent=1 // pred_fallthru
      _
    // Predicated region
    $region54: #{tpu_custom_call.1} parent=1 // pred_check
      _
    $region55: #{tpu_custom_call.1} parent=1 // pred_check_branch
      %110 = sbr.rel (0) target = $region57
    $region56: #{tpu_custom_call.1} parent=1 // pred_region
      %111 = dma.done [#allocation6], 8192
    $region57: #{tpu_custom_call.1} parent=1 // pred_fallthru
      _
    // Predicated region
    $region58: #{tpu_custom_call.1} parent=1 // pred_check
      _
    $region59: #{tpu_custom_call.1} parent=1 // pred_check_branch
      %113 = sbr.rel (0) target = $region61
    $region60: #{tpu_custom_call.1} parent=1 // pred_region
      %114 = dma.done [#allocation9], 2048
    $region61: #{tpu_custom_call.1} parent=1 // pred_fallthru
      _
    // Predicated region
    $region62: #{tpu_custom_call.1} parent=1 // pred_check
      _
    $region63: #{tpu_custom_call.1} parent=1 // pred_check_branch
      %116 = sbr.rel (0) target = $region65
    $region64: #{tpu_custom_call.1} parent=1 // pred_region
      %117 = dma.done [#allocation9], 1024
    $region65: #{tpu_custom_call.1} parent=1 // pred_fallthru
      _
    // Predicated region
    $region66: #{tpu_custom_call.1} parent=1 // pred_check
      _
    $region67: #{tpu_custom_call.1} parent=1 // pred_check_branch
      %119 = sbr.rel (0) target = $region69
    $region68: #{tpu_custom_call.1} parent=1 // pred_region
      %120 = dma.done [#allocation12], 1024
    $region69: #{tpu_custom_call.1} parent=1 // pred_fallthru
      _
    %v122 = vld [vmem:[#allocation2] sm:$0xff]
    %v123 = vld [vmem:[#allocation2 + $0x8] sm:$0xff]
    %v124 = vpack.c.bf16 %v123, %v122
    %v125 = vld [vmem:[#allocation5] sm:$0xff]
    %v126 = vld [vmem:[#allocation5 + $0x8] sm:$0xff]
    %v127 = vld [vmem:[#allocation5 + $0x10] sm:$0xff]
    %v128 = vld [vmem:[#allocation5 + $0x18] sm:$0xff]
    %v129 = vld [vmem:[#allocation5 + $0x20] sm:$0xff]
    %v130 = vld [vmem:[#allocation5 + $0x28] sm:$0xff]
    %v131 = vld [vmem:[#allocation5 + $0x30] sm:$0xff]
    %v132 = vld [vmem:[#allocation5 + $0x38] sm:$0xff]
    %v133 = vld [vmem:[%s2] sm:$0xf]
    %v135 = vlaneseq
    %v136 = vshrl.u32 %v135, 7
    %v137 = vsub.s32 0, %v136
    %v138 = vrot.slane %v133, %v137
    %v139 = vlaneseq
    %v140 = vshrl.u32 %v139, 7
    %v141 = vsub.s32 1, %v140
    %v142 = vrot.slane %v133, %v141
    %v143 = vlaneseq
    %v144 = vshrl.u32 %v143, 7
    %v145 = vsub.s32 2, %v144
    %v146 = vrot.slane %v133, %v145
    %v147 = vlaneseq
    %v148 = vshrl.u32 %v147, 7
    %v149 = vsub.s32 3, %v148
    %v150 = vrot.slane %v133, %v149
    %v163 = vunpack.c.l.b16 %v125
    %v164 = vunpack.c.h.b16 %v125
    %v165 = vunpack.c.l.b16 %v126
    %v166 = vunpack.c.h.b16 %v126
    %v167 = vunpack.c.l.b16 %v127
    %v168 = vunpack.c.h.b16 %v127
    %v169 = vunpack.c.l.b16 %v128
    %v170 = vunpack.c.h.b16 %v128
    %v171 = vunpack.c.l.b16 %v129
    %v172 = vunpack.c.h.b16 %v129
    %v173 = vunpack.c.l.b16 %v130
    %v174 = vunpack.c.h.b16 %v130
    %v175 = vunpack.c.l.b16 %v131
    %v176 = vunpack.c.h.b16 %v131
    %v177 = vunpack.c.l.b16 %v132
    %v178 = vunpack.c.h.b16 %v132
    %v179 = vpack.c.b16 %v167, %v163
    %v180 = vpack.c.b16 %v168, %v164
    %v181 = vpack.c.b16 %v169, %v165
    %v182 = vpack.c.b16 %v170, %v166
    %v183 = vpack.c.b16 %v175, %v171
    %v184 = vpack.c.b16 %v176, %v172
    %v185 = vpack.c.b16 %v177, %v173
    %v186 = vpack.c.b16 %v178, %v174
    %vm195 = vcmask 261120
    %v197 = vsel %vm195, %v124, 0
    %199 = vmatprep.subr.bf16.mxu0 %v180
    %200 = vmatpush1.bf16.msra.mxu0 %v179
    %201 = vmatprep.subr.bf16.mxu0 %v184
    %202 = vmatpush1.bf16.msra.mxu0 %v183
    %203 = vmatprep.subr.bf16.mxu0 0
    %204 = vmatpush1.bf16.msra.mxu0 0
    %205 = vmatprep.subr.bf16.mxu0 0
    %206 = vmatpush1.bf16.msra.mxu0 0
    %207 = vmatprep.subr.bf16.mxu0 0
    %208 = vmatpush1.bf16.msra.mxu0 0
    %209 = vmatprep.subr.bf16.mxu0 0
    %210 = vmatpush1.bf16.msra.mxu0 0
    %211 = vmatprep.subr.bf16.mxu0 0
    %212 = vmatpush1.bf16.msra.mxu0 0
    %213 = vmatprep.subr.bf16.mxu0 0
    %214 = vmatpush1.bf16.msra.mxu0 0
    %215 = vmatprep.subr.bf16.mxu0 0
    %216 = vmatpush1.bf16.msra.mxu0 0
    %217 = vmatprep.subr.bf16.mxu0 0
    %218 = vmatpush1.bf16.msra.mxu0 0
    %219 = vmatprep.subr.bf16.mxu0 0
    %220 = vmatpush1.bf16.msra.mxu0 0
    %221 = vmatprep.subr.bf16.mxu0 0
    %222 = vmatpush1.bf16.msra.mxu0 0
    %223 = vmatprep.subr.bf16.mxu0 0
    %224 = vmatpush1.bf16.msra.mxu0 0
    %225 = vmatprep.subr.bf16.mxu0 0
    %226 = vmatpush1.bf16.msra.mxu0 0
    %227 = vmatprep.subr.bf16.mxu0 0
    %228 = vmatpush1.bf16.msra.mxu0 0
    %229 = vmatprep.subr.bf16.mxu0 0
    %230 = vmatpush1.bf16.msra.mxu0 0
    %231 = vmatprep.mubr.bf16.mxu0 0
    %232 = vmatmul.mubr.bf16.gmra.mrb[0].mxu0 %v197
    %v233 = vpop.f32.mrb[0].mxu0
    %v234 = vadd.f32 %v138, %v233
    %v235 = vpop.f32.mrb[0].mxu0
    %v236 = vadd.f32 %v142, %v235
    %v237 = vpop.f32.mrb[0].mxu0
    %v238 = vadd.f32 %v138, %v237
    %v239 = vpop.f32.mrb[0].mxu0
    %v240 = vadd.f32 %v142, %v239
    %241 = vdwg.mxu0
    %242 = vmatprep.subr.bf16.mxu0 %v182
    %243 = vmatpush1.bf16.msra.mxu0 %v181
    %244 = vmatprep.subr.bf16.mxu0 %v186
    %245 = vmatpush1.bf16.msra.mxu0 %v185
    %246 = vmatprep.subr.bf16.mxu0 0
    %247 = vmatpush1.bf16.msra.mxu0 0
    %248 = vmatprep.subr.bf16.mxu0 0
    %249 = vmatpush1.bf16.msra.mxu0 0
    %250 = vmatprep.subr.bf16.mxu0 0
    %251 = vmatpush1.bf16.msra.mxu0 0
    %252 = vmatprep.subr.bf16.mxu0 0
    %253 = vmatpush1.bf16.msra.mxu0 0
    %254 = vmatprep.subr.bf16.mxu0 0
    %255 = vmatpush1.bf16.msra.mxu0 0
    %256 = vmatprep.subr.bf16.mxu0 0
    %257 = vmatpush1.bf16.msra.mxu0 0
    %258 = vmatprep.subr.bf16.mxu0 0
    %259 = vmatpush1.bf16.msra.mxu0 0
    %260 = vmatprep.subr.bf16.mxu0 0
    %261 = vmatpush1.bf16.msra.mxu0 0
    %262 = vmatprep.subr.bf16.mxu0 0
    %263 = vmatpush1.bf16.msra.mxu0 0
    %264 = vmatprep.subr.bf16.mxu0 0
    %265 = vmatpush1.bf16.msra.mxu0 0
    %266 = vmatprep.subr.bf16.mxu0 0
    %267 = vmatpush1.bf16.msra.mxu0 0
    %268 = vmatprep.subr.bf16.mxu0 0
    %269 = vmatpush1.bf16.msra.mxu0 0
    %270 = vmatprep.subr.bf16.mxu0 0
    %271 = vmatpush1.bf16.msra.mxu0 0
    %272 = vmatprep.subr.bf16.mxu0 0
    %273 = vmatpush1.bf16.msra.mxu0 0
    %274 = vmatprep.mubr.bf16.mxu0 0
    %275 = vmatmul.mubr.bf16.gmra.mrb[0].mxu0 %v197
    %v276 = vpop.f32.mrb[0].mxu0
    %v277 = vadd.f32 %v146, %v276
    %v278 = vpop.f32.mrb[0].mxu0
    %v279 = vadd.f32 %v150, %v278
    %v280 = vpop.f32.mrb[0].mxu0
    %v281 = vadd.f32 %v146, %v280
    %v282 = vpop.f32.mrb[0].mxu0
    %v283 = vadd.f32 %v150, %v282
    %284 = vdwg.mxu0
    %v285 = vmax.f32 %v234, 0.0
    %v286 = vmax.f32 %v236, 0.0
    %v287 = vmax.f32 %v277, 0.0
    %v288 = vmax.f32 %v279, 0.0
    %v289 = vmax.f32 %v238, 0.0
    %v290 = vmax.f32 %v240, 0.0
    %v291 = vmax.f32 %v281, 0.0
    %v292 = vmax.f32 %v283, 0.0
    %v293 = vpack.c.bf16 %v289, %v285
    %v294 = vpack.c.bf16 %v290, %v286
    %v295 = vpack.c.bf16 %v291, %v287
    %v296 = vpack.c.bf16 %v292, %v288
    %v297 = vld [vmem:[#allocation7] sm:$0xff]
    %v298 = vld [vmem:[#allocation7 + $0x8] sm:$0xff]
    %v299 = vld [vmem:[#allocation7 + $0x10] sm:$0xff]
    %v300 = vld [vmem:[#allocation7 + $0x18] sm:$0xff]
    %v301 = vld [vmem:[#allocation7 + $0x20] sm:$0xff]
    %v302 = vld [vmem:[#allocation7 + $0x28] sm:$0xff]
    %v303 = vld [vmem:[#allocation7 + $0x30] sm:$0xff]
    %v304 = vld [vmem:[#allocation7 + $0x38] sm:$0xff]
    %v305 = vld [vmem:[#allocation7 + $0x40] sm:$0xff]
    %v306 = vld [vmem:[#allocation7 + $0x48] sm:$0xff]
    %v307 = vld [vmem:[#allocation7 + $0x50] sm:$0xff]
    %v308 = vld [vmem:[#allocation7 + $0x58] sm:$0xff]
    %v309 = vld [vmem:[#allocation7 + $0x60] sm:$0xff]
    %v310 = vld [vmem:[#allocation7 + $0x68] sm:$0xff]
    %v311 = vld [vmem:[#allocation7 + $0x70] sm:$0xff]
    %v312 = vld [vmem:[#allocation7 + $0x78] sm:$0xff]
    %v313 = vld [vmem:[#allocation7 + $0x80] sm:$0xff]
    %v314 = vld [vmem:[#allocation7 + $0x88] sm:$0xff]
    %v315 = vld [vmem:[#allocation7 + $0x90] sm:$0xff]
    %v316 = vld [vmem:[#allocation7 + $0x98] sm:$0xff]
    %v317 = vld [vmem:[#allocation7 + $0xa0] sm:$0xff]
    %v318 = vld [vmem:[#allocation7 + $0xa8] sm:$0xff]
    %v319 = vld [vmem:[#allocation7 + $0xb0] sm:$0xff]
    %v320 = vld [vmem:[#allocation7 + $0xb8] sm:$0xff]
    %v321 = vld [vmem:[#allocation7 + $0xc0] sm:$0xff]
    %v322 = vld [vmem:[#allocation7 + $0xc8] sm:$0xff]
    %v323 = vld [vmem:[#allocation7 + $0xd0] sm:$0xff]
    %v324 = vld [vmem:[#allocation7 + $0xd8] sm:$0xff]
    %v325 = vld [vmem:[#allocation7 + $0xe0] sm:$0xff]
    %v326 = vld [vmem:[#allocation7 + $0xe8] sm:$0xff]
    %v327 = vld [vmem:[#allocation7 + $0xf0] sm:$0xff]
    %v328 = vld [vmem:[#allocation7 + $0xf8] sm:$0xff]
    %v329 = vld [vmem:[#allocation7 + $0x100] sm:$0xff]
    %v330 = vld [vmem:[#allocation7 + $0x108] sm:$0xff]
    %v331 = vld [vmem:[#allocation7 + $0x110] sm:$0xff]
    %v332 = vld [vmem:[#allocation7 + $0x118] sm:$0xff]
    %v333 = vld [vmem:[#allocation7 + $0x120] sm:$0xff]
    %v334 = vld [vmem:[#allocation7 + $0x128] sm:$0xff]
    %v335 = vld [vmem:[#allocation7 + $0x130] sm:$0xff]
    %v336 = vld [vmem:[#allocation7 + $0x138] sm:$0xff]
    %v337 = vld [vmem:[#allocation7 + $0x140] sm:$0xff]
    %v338 = vld [vmem:[#allocation7 + $0x148] sm:$0xff]
    %v339 = vld [vmem:[#allocation7 + $0x150] sm:$0xff]
    %v340 = vld [vmem:[#allocation7 + $0x158] sm:$0xff]
    %v341 = vld [vmem:[#allocation7 + $0x160] sm:$0xff]
    %v342 = vld [vmem:[#allocation7 + $0x168] sm:$0xff]
    %v343 = vld [vmem:[#allocation7 + $0x170] sm:$0xff]
    %v344 = vld [vmem:[#allocation7 + $0x178] sm:$0xff]
    %v345 = vld [vmem:[#allocation7 + $0x180] sm:$0xff]
    %v346 = vld [vmem:[#allocation7 + $0x188] sm:$0xff]
    %v347 = vld [vmem:[#allocation7 + $0x190] sm:$0xff]
    %v348 = vld [vmem:[#allocation7 + $0x198] sm:$0xff]
    %v349 = vld [vmem:[#allocation7 + $0x1a0] sm:$0xff]
    %v350 = vld [vmem:[#allocation7 + $0x1a8] sm:$0xff]
    %v351 = vld [vmem:[#allocation7 + $0x1b0] sm:$0xff]
    %v352 = vld [vmem:[#allocation7 + $0x1b8] sm:$0xff]
    %v353 = vld [vmem:[#allocation7 + $0x1c0] sm:$0xff]
    %v354 = vld [vmem:[#allocation7 + $0x1c8] sm:$0xff]
    %v355 = vld [vmem:[#allocation7 + $0x1d0] sm:$0xff]
    %v356 = vld [vmem:[#allocation7 + $0x1d8] sm:$0xff]
    %v357 = vld [vmem:[#allocation7 + $0x1e0] sm:$0xff]
    %v358 = vld [vmem:[#allocation7 + $0x1e8] sm:$0xff]
    %v359 = vld [vmem:[#allocation7 + $0x1f0] sm:$0xff]
    %v360 = vld [vmem:[#allocation7 + $0x1f8] sm:$0xff]
    %v361 = vld [vmem:[%s4] sm:$0x3]
    %v363 = vlaneseq
    %v364 = vshrl.u32 %v363, 7
    %v365 = vsub.s32 0, %v364
    %v366 = vrot.slane %v361, %v365
    %v367 = vlaneseq
    %v368 = vshrl.u32 %v367, 7
    %v369 = vsub.s32 1, %v368
    %v370 = vrot.slane %v361, %v369
    %v437 = vunpack.c.l.b16 %v297
    %v438 = vunpack.c.h.b16 %v297
    %v439 = vunpack.c.l.b16 %v298
    %v440 = vunpack.c.h.b16 %v298
    %v441 = vunpack.c.l.b16 %v299
    %v442 = vunpack.c.h.b16 %v299
    %v443 = vunpack.c.l.b16 %v300
    %v444 = vunpack.c.h.b16 %v300
    %v445 = vunpack.c.l.b16 %v301
    %v446 = vunpack.c.h.b16 %v301
    %v447 = vunpack.c.l.b16 %v302
    %v448 = vunpack.c.h.b16 %v302
    %v449 = vunpack.c.l.b16 %v303
    %v450 = vunpack.c.h.b16 %v303
    %v451 = vunpack.c.l.b16 %v304
    %v452 = vunpack.c.h.b16 %v304
    %v453 = vunpack.c.l.b16 %v305
    %v454 = vunpack.c.h.b16 %v305
    %v455 = vunpack.c.l.b16 %v306
    %v456 = vunpack.c.h.b16 %v306
    %v457 = vunpack.c.l.b16 %v307
    %v458 = vunpack.c.h.b16 %v307
    %v459 = vunpack.c.l.b16 %v308
    %v460 = vunpack.c.h.b16 %v308
    %v461 = vunpack.c.l.b16 %v309
    %v462 = vunpack.c.h.b16 %v309
    %v463 = vunpack.c.l.b16 %v310
    %v464 = vunpack.c.h.b16 %v310
    %v465 = vunpack.c.l.b16 %v311
    %v466 = vunpack.c.h.b16 %v311
    %v467 = vunpack.c.l.b16 %v312
    %v468 = vunpack.c.h.b16 %v312
    %v469 = vunpack.c.l.b16 %v313
    %v470 = vunpack.c.h.b16 %v313
    %v471 = vunpack.c.l.b16 %v314
    %v472 = vunpack.c.h.b16 %v314
    %v473 = vunpack.c.l.b16 %v315
    %v474 = vunpack.c.h.b16 %v315
    %v475 = vunpack.c.l.b16 %v316
    %v476 = vunpack.c.h.b16 %v316
    %v477 = vunpack.c.l.b16 %v317
    %v478 = vunpack.c.h.b16 %v317
    %v479 = vunpack.c.l.b16 %v318
    %v480 = vunpack.c.h.b16 %v318
    %v481 = vunpack.c.l.b16 %v319
    %v482 = vunpack.c.h.b16 %v319
    %v483 = vunpack.c.l.b16 %v320
    %v484 = vunpack.c.h.b16 %v320
    %v485 = vunpack.c.l.b16 %v321
    %v486 = vunpack.c.h.b16 %v321
    %v487 = vunpack.c.l.b16 %v322
    %v488 = vunpack.c.h.b16 %v322
    %v489 = vunpack.c.l.b16 %v323
    %v490 = vunpack.c.h.b16 %v323
    %v491 = vunpack.c.l.b16 %v324
    %v492 = vunpack.c.h.b16 %v324
    %v493 = vunpack.c.l.b16 %v325
    %v494 = vunpack.c.h.b16 %v325
    %v495 = vunpack.c.l.b16 %v326
    %v496 = vunpack.c.h.b16 %v326
    %v497 = vunpack.c.l.b16 %v327
    %v498 = vunpack.c.h.b16 %v327
    %v499 = vunpack.c.l.b16 %v328
    %v500 = vunpack.c.h.b16 %v328
    %v501 = vunpack.c.l.b16 %v329
    %v502 = vunpack.c.h.b16 %v329
    %v503 = vunpack.c.l.b16 %v330
    %v504 = vunpack.c.h.b16 %v330
    %v505 = vunpack.c.l.b16 %v331
    %v506 = vunpack.c.h.b16 %v331
    %v507 = vunpack.c.l.b16 %v332
    %v508 = vunpack.c.h.b16 %v332
    %v509 = vunpack.c.l.b16 %v333
    %v510 = vunpack.c.h.b16 %v333
    %v511 = vunpack.c.l.b16 %v334
    %v512 = vunpack.c.h.b16 %v334
    %v513 = vunpack.c.l.b16 %v335
    %v514 = vunpack.c.h.b16 %v335
    %v515 = vunpack.c.l.b16 %v336
    %v516 = vunpack.c.h.b16 %v336
    %v517 = vunpack.c.l.b16 %v337
    %v518 = vunpack.c.h.b16 %v337
    %v519 = vunpack.c.l.b16 %v338
    %v520 = vunpack.c.h.b16 %v338
    %v521 = vunpack.c.l.b16 %v339
    %v522 = vunpack.c.h.b16 %v339
    %v523 = vunpack.c.l.b16 %v340
    %v524 = vunpack.c.h.b16 %v340
    %v525 = vunpack.c.l.b16 %v341
    %v526 = vunpack.c.h.b16 %v341
    %v527 = vunpack.c.l.b16 %v342
    %v528 = vunpack.c.h.b16 %v342
    %v529 = vunpack.c.l.b16 %v343
    %v530 = vunpack.c.h.b16 %v343
    %v531 = vunpack.c.l.b16 %v344
    %v532 = vunpack.c.h.b16 %v344
    %v533 = vunpack.c.l.b16 %v345
    %v534 = vunpack.c.h.b16 %v345
    %v535 = vunpack.c.l.b16 %v346
    %v536 = vunpack.c.h.b16 %v346
    %v537 = vunpack.c.l.b16 %v347
    %v538 = vunpack.c.h.b16 %v347
    %v539 = vunpack.c.l.b16 %v348
    %v540 = vunpack.c.h.b16 %v348
    %v541 = vunpack.c.l.b16 %v349
    %v542 = vunpack.c.h.b16 %v349
    %v543 = vunpack.c.l.b16 %v350
    %v544 = vunpack.c.h.b16 %v350
    %v545 = vunpack.c.l.b16 %v351
    %v546 = vunpack.c.h.b16 %v351
    %v547 = vunpack.c.l.b16 %v352
    %v548 = vunpack.c.h.b16 %v352
    %v549 = vunpack.c.l.b16 %v353
    %v550 = vunpack.c.h.b16 %v353
    %v551 = vunpack.c.l.b16 %v354
    %v552 = vunpack.c.h.b16 %v354
    %v553 = vunpack.c.l.b16 %v355
    %v554 = vunpack.c.h.b16 %v355
    %v555 = vunpack.c.l.b16 %v356
    %v556 = vunpack.c.h.b16 %v356
    %v557 = vunpack.c.l.b16 %v357
    %v558 = vunpack.c.h.b16 %v357
    %v559 = vunpack.c.l.b16 %v358
    %v560 = vunpack.c.h.b16 %v358
    %v561 = vunpack.c.l.b16 %v359
    %v562 = vunpack.c.h.b16 %v359
    %v563 = vunpack.c.l.b16 %v360
    %v564 = vunpack.c.h.b16 %v360
    %v565 = vpack.c.b16 %v439, %v437
    %v566 = vpack.c.b16 %v440, %v438
    %v567 = vpack.c.b16 %v443, %v441
    %v568 = vpack.c.b16 %v444, %v442
    %v569 = vpack.c.b16 %v447, %v445
    %v570 = vpack.c.b16 %v448, %v446
    %v571 = vpack.c.b16 %v451, %v449
    %v572 = vpack.c.b16 %v452, %v450
    %v573 = vpack.c.b16 %v455, %v453
    %v574 = vpack.c.b16 %v456, %v454
    %v575 = vpack.c.b16 %v459, %v457
    %v576 = vpack.c.b16 %v460, %v458
    %v577 = vpack.c.b16 %v463, %v461
    %v578 = vpack.c.b16 %v464, %v462
    %v579 = vpack.c.b16 %v467, %v465
    %v580 = vpack.c.b16 %v468, %v466
    %v581 = vpack.c.b16 %v471, %v469
    %v582 = vpack.c.b16 %v472, %v470
    %v583 = vpack.c.b16 %v475, %v473
    %v584 = vpack.c.b16 %v476, %v474
    %v585 = vpack.c.b16 %v479, %v477
    %v586 = vpack.c.b16 %v480, %v478
    %v587 = vpack.c.b16 %v483, %v481
    %v588 = vpack.c.b16 %v484, %v482
    %v589 = vpack.c.b16 %v487, %v485
    %v590 = vpack.c.b16 %v488, %v486
    %v591 = vpack.c.b16 %v491, %v489
    %v592 = vpack.c.b16 %v492, %v490
    %v593 = vpack.c.b16 %v495, %v493
    %v594 = vpack.c.b16 %v496, %v494
    %v595 = vpack.c.b16 %v499, %v497
    %v596 = vpack.c.b16 %v500, %v498
    %v597 = vpack.c.b16 %v503, %v501
    %v598 = vpack.c.b16 %v504, %v502
    %v599 = vpack.c.b16 %v507, %v505
    %v600 = vpack.c.b16 %v508, %v506
    %v601 = vpack.c.b16 %v511, %v509
    %v602 = vpack.c.b16 %v512, %v510
    %v603 = vpack.c.b16 %v515, %v513
    %v604 = vpack.c.b16 %v516, %v514
    %v605 = vpack.c.b16 %v519, %v517
    %v606 = vpack.c.b16 %v520, %v518
    %v607 = vpack.c.b16 %v523, %v521
    %v608 = vpack.c.b16 %v524, %v522
    %v609 = vpack.c.b16 %v527, %v525
    %v610 = vpack.c.b16 %v528, %v526
    %v611 = vpack.c.b16 %v531, %v529
    %v612 = vpack.c.b16 %v532, %v530
    %v613 = vpack.c.b16 %v535, %v533
    %v614 = vpack.c.b16 %v536, %v534
    %v615 = vpack.c.b16 %v539, %v537
    %v616 = vpack.c.b16 %v540, %v538
    %v617 = vpack.c.b16 %v543, %v541
    %v618 = vpack.c.b16 %v544, %v542
    %v619 = vpack.c.b16 %v547, %v545
    %v620 = vpack.c.b16 %v548, %v546
    %v621 = vpack.c.b16 %v551, %v549
    %v622 = vpack.c.b16 %v552, %v550
    %v623 = vpack.c.b16 %v555, %v553
    %v624 = vpack.c.b16 %v556, %v554
    %v625 = vpack.c.b16 %v559, %v557
    %v626 = vpack.c.b16 %v560, %v558
    %v627 = vpack.c.b16 %v563, %v561
    %v628 = vpack.c.b16 %v564, %v562
    %693 = vmatprep.subr.bf16.mxu0 %v566
    %694 = vmatpush1.bf16.msra.mxu0 %v565
    %695 = vmatprep.subr.bf16.mxu0 %v568
    %696 = vmatpush1.bf16.msra.mxu0 %v567
    %697 = vmatprep.subr.bf16.mxu0 %v570
    %698 = vmatpush1.bf16.msra.mxu0 %v569
    %699 = vmatprep.subr.bf16.mxu0 %v572
    %700 = vmatpush1.bf16.msra.mxu0 %v571
    %701 = vmatprep.subr.bf16.mxu0 %v574
    %702 = vmatpush1.bf16.msra.mxu0 %v573
    %703 = vmatprep.subr.bf16.mxu0 %v576
    %704 = vmatpush1.bf16.msra.mxu0 %v575
    %705 = vmatprep.subr.bf16.mxu0 %v578
    %706 = vmatpush1.bf16.msra.mxu0 %v577
    %707 = vmatprep.subr.bf16.mxu0 %v580
    %708 = vmatpush1.bf16.msra.mxu0 %v579
    %709 = vmatprep.subr.bf16.mxu0 %v582
    %710 = vmatpush1.bf16.msra.mxu0 %v581
    %711 = vmatprep.subr.bf16.mxu0 %v584
    %712 = vmatpush1.bf16.msra.mxu0 %v583
    %713 = vmatprep.subr.bf16.mxu0 %v586
    %714 = vmatpush1.bf16.msra.mxu0 %v585
    %715 = vmatprep.subr.bf16.mxu0 %v588
    %716 = vmatpush1.bf16.msra.mxu0 %v587
    %717 = vmatprep.subr.bf16.mxu0 %v590
    %718 = vmatpush1.bf16.msra.mxu0 %v589
    %719 = vmatprep.subr.bf16.mxu0 %v592
    %720 = vmatpush1.bf16.msra.mxu0 %v591
    %721 = vmatprep.subr.bf16.mxu0 %v594
    %722 = vmatpush1.bf16.msra.mxu0 %v593
    %723 = vmatprep.subr.bf16.mxu0 %v596
    %724 = vmatpush1.bf16.msra.mxu0 %v595
    %725 = vmatprep.mubr.bf16.mxu0 %v294
    %726 = vmatmul.mubr.bf16.gmra.mrb[0].mxu0 %v293
    %v727 = vpop.f32.mrb[0].mxu0
    %v728 = vadd.f32 %v366, %v727
    %v729 = vpop.f32.mrb[0].mxu0
    %v730 = vadd.f32 %v370, %v729
    %v731 = vpop.f32.mrb[0].mxu0
    %v732 = vadd.f32 %v366, %v731
    %v733 = vpop.f32.mrb[0].mxu0
    %v734 = vadd.f32 %v370, %v733
    %735 = vdwg.mxu0
    %736 = vmatprep.subr.bf16.mxu0 %v598
    %737 = vmatpush1.bf16.msra.mxu0 %v597
    %738 = vmatprep.subr.bf16.mxu0 %v600
    %739 = vmatpush1.bf16.msra.mxu0 %v599
    %740 = vmatprep.subr.bf16.mxu0 %v602
    %741 = vmatpush1.bf16.msra.mxu0 %v601
    %742 = vmatprep.subr.bf16.mxu0 %v604
    %743 = vmatpush1.bf16.msra.mxu0 %v603
    %744 = vmatprep.subr.bf16.mxu0 %v606
    %745 = vmatpush1.bf16.msra.mxu0 %v605
    %746 = vmatprep.subr.bf16.mxu0 %v608
    %747 = vmatpush1.bf16.msra.mxu0 %v607
    %748 = vmatprep.subr.bf16.mxu0 %v610
    %749 = vmatpush1.bf16.msra.mxu0 %v609
    %750 = vmatprep.subr.bf16.mxu0 %v612
    %751 = vmatpush1.bf16.msra.mxu0 %v611
    %752 = vmatprep.subr.bf16.mxu0 %v614
    %753 = vmatpush1.bf16.msra.mxu0 %v613
    %754 = vmatprep.subr.bf16.mxu0 %v616
    %755 = vmatpush1.bf16.msra.mxu0 %v615
    %756 = vmatprep.subr.bf16.mxu0 %v618
    %757 = vmatpush1.bf16.msra.mxu0 %v617
    %758 = vmatprep.subr.bf16.mxu0 %v620
    %759 = vmatpush1.bf16.msra.mxu0 %v619
    %760 = vmatprep.subr.bf16.mxu0 %v622
    %761 = vmatpush1.bf16.msra.mxu0 %v621
    %762 = vmatprep.subr.bf16.mxu0 %v624
    %763 = vmatpush1.bf16.msra.mxu0 %v623
    %764 = vmatprep.subr.bf16.mxu0 %v626
    %765 = vmatpush1.bf16.msra.mxu0 %v625
    %766 = vmatprep.subr.bf16.mxu0 %v628
    %767 = vmatpush1.bf16.msra.mxu0 %v627
    %768 = vmatprep.mubr.bf16.mxu0 %v296
    %769 = vmatmul.mubr.bf16.gmra.mrb[0].mxu0 %v295
    %v770 = vpop.f32.mrb[0].mxu0
    %v771 = vadd.f32 %v728, %v770
    %v772 = vpop.f32.mrb[0].mxu0
    %v773 = vadd.f32 %v730, %v772
    %v774 = vpop.f32.mrb[0].mxu0
    %v775 = vadd.f32 %v732, %v774
    %v776 = vpop.f32.mrb[0].mxu0
    %v777 = vadd.f32 %v734, %v776
    %778 = vdwg.mxu0
    %v779 = vmax.f32 %v771, 0.0
    %v780 = vmax.f32 %v773, 0.0
    %v781 = vmax.f32 %v775, 0.0
    %v782 = vmax.f32 %v777, 0.0
    %v783 = vpack.c.bf16 %v781, %v779
    %v784 = vpack.c.bf16 %v782, %v780
    %v785 = vld [vmem:[#allocation8] sm:$0xf]
    %v786 = vld [vmem:[#allocation8 + $0x4] sm:$0xf]
    %v787 = vld [vmem:[#allocation8 + $0x8] sm:$0xf]
    %v788 = vld [vmem:[#allocation8 + $0xc] sm:$0xf]
    %v789 = vld [vmem:[#allocation8 + $0x10] sm:$0xf]
    %v790 = vld [vmem:[#allocation8 + $0x14] sm:$0xf]
    %v791 = vld [vmem:[#allocation8 + $0x18] sm:$0xf]
    %v792 = vld [vmem:[#allocation8 + $0x1c] sm:$0xf]
    %v793 = vld [vmem:[#allocation8 + $0x20] sm:$0xf]
    %v794 = vld [vmem:[#allocation8 + $0x24] sm:$0xf]
    %v795 = vld [vmem:[#allocation8 + $0x28] sm:$0xf]
    %v796 = vld [vmem:[#allocation8 + $0x2c] sm:$0xf]
    %v797 = vld [vmem:[#allocation8 + $0x30] sm:$0xf]
    %v798 = vld [vmem:[#allocation8 + $0x34] sm:$0xf]
    %v799 = vld [vmem:[#allocation8 + $0x38] sm:$0xf]
    %v800 = vld [vmem:[#allocation8 + $0x3c] sm:$0xf]
    %v801 = vld [vmem:[#allocation8 + $0x40] sm:$0xf]
    %v802 = vld [vmem:[#allocation8 + $0x44] sm:$0xf]
    %v803 = vld [vmem:[#allocation8 + $0x48] sm:$0xf]
    %v804 = vld [vmem:[#allocation8 + $0x4c] sm:$0xf]
    %v805 = vld [vmem:[#allocation8 + $0x50] sm:$0xf]
    %v806 = vld [vmem:[#allocation8 + $0x54] sm:$0xf]
    %v807 = vld [vmem:[#allocation8 + $0x58] sm:$0xf]
    %v808 = vld [vmem:[#allocation8 + $0x5c] sm:$0xf]
    %v809 = vld [vmem:[#allocation8 + $0x60] sm:$0xf]
    %v810 = vld [vmem:[#allocation8 + $0x64] sm:$0xf]
    %v811 = vld [vmem:[#allocation8 + $0x68] sm:$0xf]
    %v812 = vld [vmem:[#allocation8 + $0x6c] sm:$0xf]
    %v813 = vld [vmem:[#allocation8 + $0x70] sm:$0xf]
    %v814 = vld [vmem:[#allocation8 + $0x74] sm:$0xf]
    %v815 = vld [vmem:[#allocation8 + $0x78] sm:$0xf]
    %v816 = vld [vmem:[#allocation8 + $0x7c] sm:$0xf]
    %v817 = vld [vmem:[%s6] sm:$0x1]
    %v819 = vlaneseq
    %v820 = vshrl.u32 %v819, 7
    %v821 = vsub.s32 0, %v820
    %v822 = vrot.slane %v817, %v821
    %v856 = vunpack.c.l.b16 %v785
    %v857 = vunpack.c.l.b16 %v786
    %v858 = vunpack.c.l.b16 %v787
    %v859 = vunpack.c.l.b16 %v788
    %v860 = vunpack.c.l.b16 %v789
    %v861 = vunpack.c.l.b16 %v790
    %v862 = vunpack.c.l.b16 %v791
    %v863 = vunpack.c.l.b16 %v792
    %v864 = vunpack.c.l.b16 %v793
    %v865 = vunpack.c.l.b16 %v794
    %v866 = vunpack.c.l.b16 %v795
    %v867 = vunpack.c.l.b16 %v796
    %v868 = vunpack.c.l.b16 %v797
    %v869 = vunpack.c.l.b16 %v798
    %v870 = vunpack.c.l.b16 %v799
    %v871 = vunpack.c.l.b16 %v800
    %v872 = vunpack.c.l.b16 %v801
    %v873 = vunpack.c.l.b16 %v802
    %v874 = vunpack.c.l.b16 %v803
    %v875 = vunpack.c.l.b16 %v804
    %v876 = vunpack.c.l.b16 %v805
    %v877 = vunpack.c.l.b16 %v806
    %v878 = vunpack.c.l.b16 %v807
    %v879 = vunpack.c.l.b16 %v808
    %v880 = vunpack.c.l.b16 %v809
    %v881 = vunpack.c.l.b16 %v810
    %v882 = vunpack.c.l.b16 %v811
    %v883 = vunpack.c.l.b16 %v812
    %v884 = vunpack.c.l.b16 %v813
    %v885 = vunpack.c.l.b16 %v814
    %v886 = vunpack.c.l.b16 %v815
    %v887 = vunpack.c.l.b16 %v816
    %v888 = vpack.c.b16 %v857, %v856
    %v889 = vpack.c.b16 %v859, %v858
    %v890 = vpack.c.b16 %v861, %v860
    %v891 = vpack.c.b16 %v863, %v862
    %v892 = vpack.c.b16 %v865, %v864
    %v893 = vpack.c.b16 %v867, %v866
    %v894 = vpack.c.b16 %v869, %v868
    %v895 = vpack.c.b16 %v871, %v870
    %v896 = vpack.c.b16 %v873, %v872
    %v897 = vpack.c.b16 %v875, %v874
    %v898 = vpack.c.b16 %v877, %v876
    %v899 = vpack.c.b16 %v879, %v878
    %v900 = vpack.c.b16 %v881, %v880
    %v901 = vpack.c.b16 %v883, %v882
    %v902 = vpack.c.b16 %v885, %v884
    %v903 = vpack.c.b16 %v887, %v886
    %920 = vmatprep.subr.bf16.mxu0 0
    %921 = vmatpush1.bf16.msra.mxu0 %v888
    %922 = vmatprep.subr.bf16.mxu0 0
    %923 = vmatpush1.bf16.msra.mxu0 %v889
    %924 = vmatprep.subr.bf16.mxu0 0
    %925 = vmatpush1.bf16.msra.mxu0 %v890
    %926 = vmatprep.subr.bf16.mxu0 0
    %927 = vmatpush1.bf16.msra.mxu0 %v891
    %928 = vmatprep.subr.bf16.mxu0 0
    %929 = vmatpush1.bf16.msra.mxu0 %v892
    %930 = vmatprep.subr.bf16.mxu0 0
    %931 = vmatpush1.bf16.msra.mxu0 %v893
    %932 = vmatprep.subr.bf16.mxu0 0
    %933 = vmatpush1.bf16.msra.mxu0 %v894
    %934 = vmatprep.subr.bf16.mxu0 0
    %935 = vmatpush1.bf16.msra.mxu0 %v895
    %936 = vmatprep.subr.bf16.mxu0 0
    %937 = vmatpush1.bf16.msra.mxu0 %v896
    %938 = vmatprep.subr.bf16.mxu0 0
    %939 = vmatpush1.bf16.msra.mxu0 %v897
    %940 = vmatprep.subr.bf16.mxu0 0
    %941 = vmatpush1.bf16.msra.mxu0 %v898
    %942 = vmatprep.subr.bf16.mxu0 0
    %943 = vmatpush1.bf16.msra.mxu0 %v899
    %944 = vmatprep.subr.bf16.mxu0 0
    %945 = vmatpush1.bf16.msra.mxu0 %v900
    %946 = vmatprep.subr.bf16.mxu0 0
    %947 = vmatpush1.bf16.msra.mxu0 %v901
    %948 = vmatprep.subr.bf16.mxu0 0
    %949 = vmatpush1.bf16.msra.mxu0 %v902
    %950 = vmatprep.subr.bf16.mxu0 0
    %951 = vmatpush1.bf16.msra.mxu0 %v903
    %952 = vmatprep.mubr.bf16.mxu0 %v784
    %953 = vmatmul.mubr.bf16.gmra.mrb[0].mxu0 %v783
    %v954 = vpop.f32.mrb[0].mxu0
    %v955 = vadd.f32 %v822, %v954
    %v956 = vpop.f32.mrb[0].mxu0
    %v957 = vpop.f32.mrb[0].mxu0
    %v958 = vadd.f32 %v822, %v957
    %v959 = vpop.f32.mrb[0].mxu0
    %960 = vdwg.mxu0
    %v961 = vmax.f32 %v955, 0.0
    %v962 = vmax.f32 %v958, 0.0
    %v963 = vpack.c.bf16 %v962, %v961
    %v964 = vld [vmem:[#allocation10] sm:$0xf]
    %v965 = vld [vmem:[#allocation10 + $0x4] sm:$0xf]
    %v966 = vld [vmem:[#allocation10 + $0x8] sm:$0xf]
    %v967 = vld [vmem:[#allocation10 + $0xc] sm:$0xf]
    %v968 = vld [vmem:[#allocation10 + $0x10] sm:$0xf]
    %v969 = vld [vmem:[#allocation10 + $0x14] sm:$0xf]
    %v970 = vld [vmem:[#allocation10 + $0x18] sm:$0xf]
    %v971 = vld [vmem:[#allocation10 + $0x1c] sm:$0xf]
    %v972 = vld [vmem:[#allocation10 + $0x20] sm:$0xf]
    %v973 = vld [vmem:[#allocation10 + $0x24] sm:$0xf]
    %v974 = vld [vmem:[#allocation10 + $0x28] sm:$0xf]
    %v975 = vld [vmem:[#allocation10 + $0x2c] sm:$0xf]
    %v976 = vld [vmem:[#allocation10 + $0x30] sm:$0xf]
    %v977 = vld [vmem:[#allocation10 + $0x34] sm:$0xf]
    %v978 = vld [vmem:[#allocation10 + $0x38] sm:$0xf]
    %v979 = vld [vmem:[#allocation10 + $0x3c] sm:$0xf]
    %v980 = vld [vmem:[%s8] sm:$0x1]
    %v982 = vlaneseq
    %v983 = vshrl.u32 %v982, 7
    %v984 = vsub.s32 0, %v983
    %v985 = vrot.slane %v980, %v984
    %v1003 = vunpack.c.l.b16 %v964
    %v1004 = vunpack.c.l.b16 %v965
    %v1005 = vunpack.c.l.b16 %v966
    %v1006 = vunpack.c.l.b16 %v967
    %v1007 = vunpack.c.l.b16 %v968
    %v1008 = vunpack.c.l.b16 %v969
    %v1009 = vunpack.c.l.b16 %v970
    %v1010 = vunpack.c.l.b16 %v971
    %v1011 = vunpack.c.l.b16 %v972
    %v1012 = vunpack.c.l.b16 %v973
    %v1013 = vunpack.c.l.b16 %v974
    %v1014 = vunpack.c.l.b16 %v975
    %v1015 = vunpack.c.l.b16 %v976
    %v1016 = vunpack.c.l.b16 %v977
    %v1017 = vunpack.c.l.b16 %v978
    %v1018 = vunpack.c.l.b16 %v979
    %v1019 = vpack.c.b16 %v1004, %v1003
    %v1020 = vpack.c.b16 %v1006, %v1005
    %v1021 = vpack.c.b16 %v1008, %v1007
    %v1022 = vpack.c.b16 %v1010, %v1009
    %v1023 = vpack.c.b16 %v1012, %v1011
    %v1024 = vpack.c.b16 %v1014, %v1013
    %v1025 = vpack.c.b16 %v1016, %v1015
    %v1026 = vpack.c.b16 %v1018, %v1017
    %1035 = vmatprep.subr.bf16.mxu0 0
    %1036 = vmatpush1.bf16.msra.mxu0 %v1019
    %1037 = vmatprep.subr.bf16.mxu0 0
    %1038 = vmatpush1.bf16.msra.mxu0 %v1020
    %1039 = vmatprep.subr.bf16.mxu0 0
    %1040 = vmatpush1.bf16.msra.mxu0 %v1021
    %1041 = vmatprep.subr.bf16.mxu0 0
    %1042 = vmatpush1.bf16.msra.mxu0 %v1022
    %1043 = vmatprep.subr.bf16.mxu0 0
    %1044 = vmatpush1.bf16.msra.mxu0 %v1023
    %1045 = vmatprep.subr.bf16.mxu0 0
    %1046 = vmatpush1.bf16.msra.mxu0 %v1024
    %1047 = vmatprep.subr.bf16.mxu0 0
    %1048 = vmatpush1.bf16.msra.mxu0 %v1025
    %1049 = vmatprep.subr.bf16.mxu0 0
    %1050 = vmatpush1.bf16.msra.mxu0 %v1026
    %1051 = vmatprep.subr.bf16.mxu0 0
    %1052 = vmatpush1.bf16.msra.mxu0 0
    %1053 = vmatprep.subr.bf16.mxu0 0
    %1054 = vmatpush1.bf16.msra.mxu0 0
    %1055 = vmatprep.subr.bf16.mxu0 0
    %1056 = vmatpush1.bf16.msra.mxu0 0
    %1057 = vmatprep.subr.bf16.mxu0 0
    %1058 = vmatpush1.bf16.msra.mxu0 0
    %1059 = vmatprep.subr.bf16.mxu0 0
    %1060 = vmatpush1.bf16.msra.mxu0 0
    %1061 = vmatprep.subr.bf16.mxu0 0
    %1062 = vmatpush1.bf16.msra.mxu0 0
    %1063 = vmatprep.subr.bf16.mxu0 0
    %1064 = vmatpush1.bf16.msra.mxu0 0
    %1065 = vmatprep.subr.bf16.mxu0 0
    %1066 = vmatpush1.bf16.msra.mxu0 0
    %1067 = vmatprep.mubr.bf16.mxu0 0
    %1068 = vmatmul.mubr.bf16.gmra.mrb[0].mxu0 %v963
    %v1069 = vpop.f32.mrb[0].mxu0
    %v1070 = vadd.f32 %v985, %v1069
    %v1071 = vpop.f32.mrb[0].mxu0
    %v1072 = vpop.f32.mrb[0].mxu0
    %v1073 = vadd.f32 %v985, %v1072
    %v1074 = vpop.f32.mrb[0].mxu0
    %1075 = vdwg.mxu0
    %v1076 = vmax.f32 %v1070, 0.0
    %v1077 = vmax.f32 %v1073, 0.0
    %v1078 = vpack.c.bf16 %v1077, %v1076
    %v1079 = vld [vmem:[#allocation11] sm:$0xf]
    %v1080 = vld [vmem:[#allocation11 + $0x4] sm:$0xf]
    %v1081 = vld [vmem:[#allocation11 + $0x8] sm:$0xf]
    %v1082 = vld [vmem:[#allocation11 + $0xc] sm:$0xf]
    %v1083 = vld [vmem:[#allocation11 + $0x10] sm:$0xf]
    %v1084 = vld [vmem:[#allocation11 + $0x14] sm:$0xf]
    %v1085 = vld [vmem:[#allocation11 + $0x18] sm:$0xf]
    %v1086 = vld [vmem:[#allocation11 + $0x1c] sm:$0xf]
    %v1087 = vld [vmem:[#allocation11 + $0x20] sm:$0xf]
    %v1088 = vld [vmem:[#allocation11 + $0x24] sm:$0xf]
    %v1089 = vld [vmem:[#allocation11 + $0x28] sm:$0xf]
    %v1090 = vld [vmem:[#allocation11 + $0x2c] sm:$0xf]
    %v1091 = vld [vmem:[#allocation11 + $0x30] sm:$0xf]
    %v1092 = vld [vmem:[#allocation11 + $0x34] sm:$0xf]
    %v1093 = vld [vmem:[#allocation11 + $0x38] sm:$0xf]
    %v1094 = vld [vmem:[#allocation11 + $0x3c] sm:$0xf]
    %v1095 = vld [vmem:[%s10] sm:$0x1]
    %v1097 = vlaneseq
    %v1098 = vshrl.u32 %v1097, 7
    %v1099 = vsub.s32 0, %v1098
    %v1100 = vrot.slane %v1095, %v1099
    %v1118 = vunpack.c.l.b16 %v1079
    %v1119 = vunpack.c.l.b16 %v1080
    %v1120 = vunpack.c.l.b16 %v1081
    %v1121 = vunpack.c.l.b16 %v1082
    %v1122 = vunpack.c.l.b16 %v1083
    %v1123 = vunpack.c.l.b16 %v1084
    %v1124 = vunpack.c.l.b16 %v1085
    %v1125 = vunpack.c.l.b16 %v1086
    %v1126 = vunpack.c.l.b16 %v1087
    %v1127 = vunpack.c.l.b16 %v1088
    %v1128 = vunpack.c.l.b16 %v1089
    %v1129 = vunpack.c.l.b16 %v1090
    %v1130 = vunpack.c.l.b16 %v1091
    %v1131 = vunpack.c.l.b16 %v1092
    %v1132 = vunpack.c.l.b16 %v1093
    %v1133 = vunpack.c.l.b16 %v1094
    %v1134 = vpack.c.b16 %v1119, %v1118
    %v1135 = vpack.c.b16 %v1121, %v1120
    %v1136 = vpack.c.b16 %v1123, %v1122
    %v1137 = vpack.c.b16 %v1125, %v1124
    %v1138 = vpack.c.b16 %v1127, %v1126
    %v1139 = vpack.c.b16 %v1129, %v1128
    %v1140 = vpack.c.b16 %v1131, %v1130
    %v1141 = vpack.c.b16 %v1133, %v1132
    %1150 = vmatprep.subr.bf16.mxu0 0
    %1151 = vmatpush1.bf16.msra.mxu0 %v1134
    %1152 = vmatprep.subr.bf16.mxu0 0
    %1153 = vmatpush1.bf16.msra.mxu0 %v1135
    %1154 = vmatprep.subr.bf16.mxu0 0
    %1155 = vmatpush1.bf16.msra.mxu0 %v1136
    %1156 = vmatprep.subr.bf16.mxu0 0
    %1157 = vmatpush1.bf16.msra.mxu0 %v1137
    %1158 = vmatprep.subr.bf16.mxu0 0
    %1159 = vmatpush1.bf16.msra.mxu0 %v1138
    %1160 = vmatprep.subr.bf16.mxu0 0
    %1161 = vmatpush1.bf16.msra.mxu0 %v1139
    %1162 = vmatprep.subr.bf16.mxu0 0
    %1163 = vmatpush1.bf16.msra.mxu0 %v1140
    %1164 = vmatprep.subr.bf16.mxu0 0
    %1165 = vmatpush1.bf16.msra.mxu0 %v1141
    %1166 = vmatprep.subr.bf16.mxu0 0
    %1167 = vmatpush1.bf16.msra.mxu0 0
    %1168 = vmatprep.subr.bf16.mxu0 0
    %1169 = vmatpush1.bf16.msra.mxu0 0
    %1170 = vmatprep.subr.bf16.mxu0 0
    %1171 = vmatpush1.bf16.msra.mxu0 0
    %1172 = vmatprep.subr.bf16.mxu0 0
    %1173 = vmatpush1.bf16.msra.mxu0 0
    %1174 = vmatprep.subr.bf16.mxu0 0
    %1175 = vmatpush1.bf16.msra.mxu0 0
    %1176 = vmatprep.subr.bf16.mxu0 0
    %1177 = vmatpush1.bf16.msra.mxu0 0
    %1178 = vmatprep.subr.bf16.mxu0 0
    %1179 = vmatpush1.bf16.msra.mxu0 0
    %1180 = vmatprep.subr.bf16.mxu0 0
    %1181 = vmatpush1.bf16.msra.mxu0 0
    %1182 = vmatprep.mubr.bf16.mxu0 0
    %1183 = vmatmul.mubr.bf16.gmra.mrb[0].mxu0 %v1078
    %v1184 = vpop.f32.mrb[0].mxu0
    %v1185 = vadd.f32 %v1100, %v1184
    %v1186 = vpop.f32.mrb[0].mxu0
    %v1187 = vpop.f32.mrb[0].mxu0
    %v1188 = vadd.f32 %v1100, %v1187
    %v1189 = vpop.f32.mrb[0].mxu0
    %1190 = vdwg.mxu0
    %1191 = vst [vmem:[#allocation13] sm:$0xff] %v1185
    %1192 = vst [vmem:[#allocation13 + $0x8] sm:$0xff] %v1188
    // Predicated region
    $region70: #{tpu_custom_call.1} parent=1 // pred_check
      _
    $region71: #{tpu_custom_call.1} parent=1 // pred_check_branch
      %1194 = sbr.rel (0) target = $region73
    $region72: #{tpu_custom_call.1} parent=1 // pred_region
      %s1196 = ssub.s32 256, 256
      %1197 = vsyncadd [#allocation4], %s1196
      %s1198 = sshll.u32 [#allocation13], 4
      %s1199 = int_to_ptr.vmem [resolvable:$true] %s1198
      %1204 = dma.vmem_to_hbm [thread:$0]  %s1199, 256, %s11, [#allocation4], 128, 128, 8
    $region73: #{tpu_custom_call.1} parent=1 // pred_fallthru
      _
    // Predicated region
    $region74: #{tpu_custom_call.1} parent=1 // pred_check
      _
    $region75: #{tpu_custom_call.1} parent=1 // pred_check_branch
      %1206 = sbr.rel (0) target = $region77
    $region76: #{tpu_custom_call.1} parent=1 // pred_region
      %1207 = dma.done [#allocation4], 256
    $region77: #{tpu_custom_call.1} parent=1 // pred_fallthru
      _
    %1208 = vsyncpa [#allocation3], 1
    %1209 = vsyncpa [#allocation6], 1
    %1210 = vsyncpa [#allocation9], 1
    %1211 = vsyncpa [#allocation12], 1
    %1212 = vsyncpa [#allocation4], 1

// kernel: tpu_custom_call.1
$region0: #{tpu_custom_call.1}
  #allocation0 [shape = 'u32[]', space=smem, size = 0x4, offset = 0x4, fixed_abs, tag = 'smem constant byte address 0x4 - core index']
  #allocation1 [shape = 'u32[144,128]{1,0:T(1,128)}', space=vmem, size = 0x12000, scoped, tag = 'internal scratch']
  %s0 = inlined_call_operand.hbm [shape: f32[16,32], index: 0, kind: input, shape index: {}]
  %s1 = inlined_call_operand.hbm [shape: bf16[32,512], index: 1, kind: input, shape index: {}]
  %s2 = inlined_call_operand.vmem [shape: f32[1,512], index: 2, kind: input, shape index: {}]
  %s3 = inlined_call_operand.hbm [shape: bf16[512,256], index: 3, kind: input, shape index: {}]
  %s4 = inlined_call_operand.vmem [shape: f32[1,256], index: 4, kind: input, shape index: {}]
  %s5 = inlined_call_operand.hbm [shape: bf16[256,128], index: 5, kind: input, shape index: {}]
  %s6 = inlined_call_operand.vmem [shape: f32[1,128], index: 6, kind: input, shape index: {}]
  %s7 = inlined_call_operand.hbm [shape: bf16[128,128], index: 7, kind: input, shape index: {}]
  %s8 = inlined_call_operand.vmem [shape: f32[1,128], index: 8, kind: input, shape index: {}]
  %s9 = inlined_call_operand.hbm [shape: bf16[128,128], index: 9, kind: input, shape index: {}]
  %s10 = inlined_call_operand.vmem [shape: f32[1,128], index: 10, kind: input, shape index: {}]
  %s11 = inlined_call_operand.hbm [shape: f32[16,128], index: 11, kind: output, shape index: {}]
  %s12 = sld [smem:[#allocation0]]
  $region78: #{tpu_custom_call.1} parent=0
    _
  %s14 = ssub.s32 1, %s12
  %s15 = scalar_select 0, %s14, %s12
  $region1: #{tpu_custom_call.1} parent=0
    #allocation2 [shape = 'u8[8192]{0}', space=vmem, size = 0x2000, scoped, tag = 'input window, operand 0, single buffered']
    #allocation3 [shape = 's32[1]{0}', space=sflag, size = 0x4, scoped, tag = 'scoped memory for tpu_custom_call.1']
    #allocation4 [shape = 's32[1]{0}', space=sflag, size = 0x4, scoped, tag = 'scoped memory for tpu_custom_call.1']
    #allocation5 [shape = 'u8[32768]{0}', space=vmem, size = 0x8000, scoped, tag = 'input window, operand 1, single buffered']
    #allocation6 [shape = 's32[1]{0}', space=sflag, size = 0x4, scoped, tag = 'scoped memory for tpu_custom_call.1']
    #allocation7 [shape = 'u8[262144]{0}', space=vmem, size = 0x40000, scoped, tag = 'input window, operand 3, single buffered']
    #allocation8 [shape = 'u8[65536]{0}', space=vmem, size = 0x10000, scoped, tag = 'input window, operand 5, single buffered']
    #allocation9 [shape = 's32[1]{0}', space=sflag, size = 0x4, scoped, tag = 'scoped memory for tpu_custom_call.1']
    #allocation10 [shape = 'u8[32768]{0}', space=vmem, size = 0x8000, scoped, tag = 'input window, operand 7, single buffered']
    #allocation11 [shape = 'u8[32768]{0}', space=vmem, size = 0x8000, scoped, tag = 'input window, operand 9, single buffered']
    #allocation12 [shape = 's32[1]{0}', space=sflag, size = 0x4, scoped, tag = 'scoped memory for tpu_custom_call.1']
    #allocation13 [shape = 'u8[8192]{0}', space=vmem, size = 0x2000, scoped, tag = 'output window, operand 0, single buffered']
    %16 = vsyncpa [#allocation3], 0
    %17 = vsyncpa [#allocation6], 0
    %18 = vsyncpa [#allocation9], 0
    %19 = vsyncpa [#allocation12], 0
    %20 = vsyncpa [#allocation4], 0
    // Predicated region
    $region2: #{tpu_custom_call.1} parent=1 // pred_check
      _
    $region3: #{tpu_custom_call.1} parent=1 // pred_check_branch
      %22 = sbr.rel (0) target = $region5
    $region4: #{tpu_custom_call.1} parent=1 // pred_region
      %s24 = ssub.s32 256, 256
      %25 = vsyncadd [#allocation3], %s24
      %s26 = sshll.u32 [#allocation2], 4
      %s27 = int_to_ptr.vmem [resolvable:$true] %s26
      %32 = dma.hbm_to_vmem [thread:$0]  %s0, 256, %s27, [#allocation3], 128, 128, 8
    $region5: #{tpu_custom_call.1} parent=1 // pred_fallthru
      _
    // Predicated region
    $region6: #{tpu_custom_call.1} parent=1 // pred_check
      _
    $region7: #{tpu_custom_call.1} parent=1 // pred_check_branch
      %34 = sbr.rel (0) target = $region9
    $region8: #{tpu_custom_call.1} parent=1 // pred_region
      %s36 = ssub.s32 1024, 1024
      %37 = vsyncadd [#allocation6], %s36
      %s38 = sshll.u32 [#allocation5], 4
      %s39 = int_to_ptr.vmem [resolvable:$true] %s38
      %44 = dma.hbm_to_vmem [thread:$0]  %s1, 1024, %s39, [#allocation6], 256, 256, 16
    $region9: #{tpu_custom_call.1} parent=1 // pred_fallthru
      _
    // Predicated region
    $region10: #{tpu_custom_call.1} parent=1 // pred_check
      _
    $region11: #{tpu_custom_call.1} parent=1 // pred_check_branch
      %46 = sbr.rel (0) target = $region13
    $region12: #{tpu_custom_call.1} parent=1 // pred_region
      _
    $region13: #{tpu_custom_call.1} parent=1 // pred_fallthru
      _
    // Predicated region
    $region14: #{tpu_custom_call.1} parent=1 // pred_check
      _
    $region15: #{tpu_custom_call.1} parent=1 // pred_check_branch
      %48 = sbr.rel (0) target = $region17
    $region16: #{tpu_custom_call.1} parent=1 // pred_region
      %s50 = ssub.s32 8192, 8192
      %51 = vsyncadd [#allocation6], %s50
      %s52 = sshll.u32 [#allocation7], 4
      %s53 = int_to_ptr.vmem [resolvable:$true] %s52
      %58 = dma.hbm_to_vmem [thread:$0]  %s3, 8192, %s53, [#allocation6], 128, 128, 8
    $region17: #{tpu_custom_call.1} parent=1 // pred_fallthru
      _
    // Predicated region
    $region18: #{tpu_custom_call.1} parent=1 // pred_check
      _
    $region19: #{tpu_custom_call.1} parent=1 // pred_check_branch
      %60 = sbr.rel (0) target = $region21
    $region20: #{tpu_custom_call.1} parent=1 // pred_region
      _
    $region21: #{tpu_custom_call.1} parent=1 // pred_fallthru
      _
    // Predicated region
    $region22: #{tpu_custom_call.1} parent=1 // pred_check
      _
    $region23: #{tpu_custom_call.1} parent=1 // pred_check_branch
      %62 = sbr.rel (0) target = $region25
    $region24: #{tpu_custom_call.1} parent=1 // pred_region
      %s64 = ssub.s32 2048, 2048
      %65 = vsyncadd [#allocation9], %s64
      %s66 = sshll.u32 [#allocation8], 4
      %s67 = int_to_ptr.vmem [resolvable:$true] %s66
      %72 = dma.hbm_to_vmem [thread:$0]  %s5, 2048, %s67, [#allocation9], 64, 64, 4
    $region25: #{tpu_custom_call.1} parent=1 // pred_fallthru
      _
    // Predicated region
    $region26: #{tpu_custom_call.1} parent=1 // pred_check
      _
    $region27: #{tpu_custom_call.1} parent=1 // pred_check_branch
      %74 = sbr.rel (0) target = $region29
    $region28: #{tpu_custom_call.1} parent=1 // pred_region
      _
    $region29: #{tpu_custom_call.1} parent=1 // pred_fallthru
      _
    // Predicated region
    $region30: #{tpu_custom_call.1} parent=1 // pred_check
      _
    $region31: #{tpu_custom_call.1} parent=1 // pred_check_branch
      %76 = sbr.rel (0) target = $region33
    $region32: #{tpu_custom_call.1} parent=1 // pred_region
      %s78 = ssub.s32 1024, 1024
      %79 = vsyncadd [#allocation9], %s78
      %s80 = sshll.u32 [#allocation10], 4
      %s81 = int_to_ptr.vmem [resolvable:$true] %s80
      %86 = dma.hbm_to_vmem [thread:$0]  %s7, 1024, %s81, [#allocation9], 64, 64, 4
    $region33: #{tpu_custom_call.1} parent=1 // pred_fallthru
      _
    // Predicated region
    $region34: #{tpu_custom_call.1} parent=1 // pred_check
      _
    $region35: #{tpu_custom_call.1} parent=1 // pred_check_branch
      %88 = sbr.rel (0) target = $region37
    $region36: #{tpu_custom_call.1} parent=1 // pred_region
      _
    $region37: #{tpu_custom_call.1} parent=1 // pred_fallthru
      _
    // Predicated region
    $region38: #{tpu_custom_call.1} parent=1 // pred_check
      _
    $region39: #{tpu_custom_call.1} parent=1 // pred_check_branch
      %90 = sbr.rel (0) target = $region41
    $region40: #{tpu_custom_call.1} parent=1 // pred_region
      %s92 = ssub.s32 1024, 1024
      %93 = vsyncadd [#allocation12], %s92
      %s94 = sshll.u32 [#allocation11], 4
      %s95 = int_to_ptr.vmem [resolvable:$true] %s94
      %100 = dma.hbm_to_vmem [thread:$0]  %s9, 1024, %s95, [#allocation12], 64, 64, 4
    $region41: #{tpu_custom_call.1} parent=1 // pred_fallthru
      _
    // Predicated region
    $region42: #{tpu_custom_call.1} parent=1 // pred_check
      _
    $region43: #{tpu_custom_call.1} parent=1 // pred_check_branch
      %102 = sbr.rel (0) target = $region45
    $region44: #{tpu_custom_call.1} parent=1 // pred_region
      _
    $region45: #{tpu_custom_call.1} parent=1 // pred_fallthru
      _
    // Predicated region
    $region46: #{tpu_custom_call.1} parent=1 // pred_check
      _
    $region47: #{tpu_custom_call.1} parent=1 // pred_check_branch
      %104 = sbr.rel (0) target = $region49
    $region48: #{tpu_custom_call.1} parent=1 // pred_region
      %105 = dma.done [#allocation3], 256
    $region49: #{tpu_custom_call.1} parent=1 // pred_fallthru
      _
    // Predicated region
    $region50: #{tpu_custom_call.1} parent=1 // pred_check
      _
    $region51: #{tpu_custom_call.1} parent=1 // pred_check_branch
      %107 = sbr.rel (0) target = $region53
    $region52: #{tpu_custom_call.1} parent=1 // pred_region
      %108 = dma.done [#allocation6], 1024
    $region53: #{tpu_custom_call.1} parent=1 // pred_fallthru
      _
    // Predicated region
    $region54: #{tpu_custom_call.1} parent=1 // pred_check
      _
    $region55: #{tpu_custom_call.1} parent=1 // pred_check_branch
      %110 = sbr.rel (0) target = $region57
    $region56: #{tpu_custom_call.1} parent=1 // pred_region
      %111 = dma.done [#allocation6], 8192
    $region57: #{tpu_custom_call.1} parent=1 // pred_fallthru
      _
    // Predicated region
    $region58: #{tpu_custom_call.1} parent=1 // pred_check
      _
    $region59: #{tpu_custom_call.1} parent=1 // pred_check_branch
      %113 = sbr.rel (0) target = $region61
    $region60: #{tpu_custom_call.1} parent=1 // pred_region
      %114 = dma.done [#allocation9], 2048
    $region61: #{tpu_custom_call.1} parent=1 // pred_fallthru
      _
    // Predicated region
    $region62: #{tpu_custom_call.1} parent=1 // pred_check
      _
    $region63: #{tpu_custom_call.1} parent=1 // pred_check_branch
      %116 = sbr.rel (0) target = $region65
    $region64: #{tpu_custom_call.1} parent=1 // pred_region
      %117 = dma.done [#allocation9], 1024
    $region65: #{tpu_custom_call.1} parent=1 // pred_fallthru
      _
    // Predicated region
    $region66: #{tpu_custom_call.1} parent=1 // pred_check
      _
    $region67: #{tpu_custom_call.1} parent=1 // pred_check_branch
      %119 = sbr.rel (0) target = $region69
    $region68: #{tpu_custom_call.1} parent=1 // pred_region
      %120 = dma.done [#allocation12], 1024
    $region69: #{tpu_custom_call.1} parent=1 // pred_fallthru
      _
    %v122 = vld [vmem:[#allocation2] sm:$0xff]
    %v123 = vld [vmem:[#allocation2 + $0x8] sm:$0xff]
    %v124 = vpack.c.bf16 %v123, %v122
    %v125 = vld [vmem:[#allocation5] sm:$0xff]
    %v126 = vld [vmem:[#allocation5 + $0x8] sm:$0xff]
    %v127 = vld [vmem:[#allocation5 + $0x10] sm:$0xff]
    %v128 = vld [vmem:[#allocation5 + $0x18] sm:$0xff]
    %v129 = vld [vmem:[#allocation5 + $0x20] sm:$0xff]
    %v130 = vld [vmem:[#allocation5 + $0x28] sm:$0xff]
    %v131 = vld [vmem:[#allocation5 + $0x30] sm:$0xff]
    %v132 = vld [vmem:[#allocation5 + $0x38] sm:$0xff]
    %v133 = vld [vmem:[%s2] sm:$0xf]
    %v135 = vlaneseq
    %v136 = vshrl.u32 %v135, 7
    %v137 = vsub.s32 0, %v136
    %v138 = vrot.slane %v133, %v137
    %v139 = vlaneseq
    %v140 = vshrl.u32 %v139, 7
    %v141 = vsub.s32 1, %v140
    %v142 = vrot.slane %v133, %v141
    %v143 = vlaneseq
    %v144 = vshrl.u32 %v143, 7
    %v145 = vsub.s32 2, %v144
    %v146 = vrot.slane %v133, %v145
    %v147 = vlaneseq
    %v148 = vshrl.u32 %v147, 7
    %v149 = vsub.s32 3, %v148
    %v150 = vrot.slane %v133, %v149
    %v163 = vunpack.c.l.b16 %v125
    %v164 = vunpack.c.h.b16 %v125
    %v165 = vunpack.c.l.b16 %v126
    %v166 = vunpack.c.h.b16 %v126
    %v167 = vunpack.c.l.b16 %v127
    %v168 = vunpack.c.h.b16 %v127
    %v169 = vunpack.c.l.b16 %v128
    %v170 = vunpack.c.h.b16 %v128
    %v171 = vunpack.c.l.b16 %v129
    %v172 = vunpack.c.h.b16 %v129
    %v173 = vunpack.c.l.b16 %v130
    %v174 = vunpack.c.h.b16 %v130
    %v175 = vunpack.c.l.b16 %v131
    %v176 = vunpack.c.h.b16 %v131
    %v177 = vunpack.c.l.b16 %v132
    %v178 = vunpack.c.h.b16 %v132
    %v179 = vpack.c.b16 %v167, %v163
    %v180 = vpack.c.b16 %v168, %v164
    %v181 = vpack.c.b16 %v169, %v165
    %v182 = vpack.c.b16 %v170, %v166
    %v183 = vpack.c.b16 %v175, %v171
    %v184 = vpack.c.b16 %v176, %v172
    %v185 = vpack.c.b16 %v177, %v173
    %v186 = vpack.c.b16 %v178, %v174
    %vm195 = vcmask 261120
    %v197 = vsel %vm195, %v124, 0
    %199 = vmatprep.subr.bf16.mxu0 %v180
    %200 = vmatpush1.bf16.msra.mxu0 %v179
    %201 = vmatprep.subr.bf16.mxu0 %v184
    %202 = vmatpush1.bf16.msra.mxu0 %v183
    %203 = vmatprep.subr.bf16.mxu0 0
    %204 = vmatpush1.bf16.msra.mxu0 0
    %205 = vmatprep.subr.bf16.mxu0 0
    %206 = vmatpush1.bf16.msra.mxu0 0
    %207 = vmatprep.subr.bf16.mxu0 0
    %208 = vmatpush1.bf16.msra.mxu0 0
    %209 = vmatprep.subr.bf16.mxu0 0
    %210 = vmatpush1.bf16.msra.mxu0 0
    %211 = vmatprep.subr.bf16.mxu0 0
    %212 = vmatpush1.bf16.msra.mxu0 0
    %213 = vmatprep.subr.bf16.mxu0 0
    %214 = vmatpush1.bf16.msra.mxu0 0
    %215 = vmatprep.subr.bf16.mxu0 0
    %216 = vmatpush1.bf16.msra.mxu0 0
    %217 = vmatprep.subr.bf16.mxu0 0
    %218 = vmatpush1.bf16.msra.mxu0 0
    %219 = vmatprep.subr.bf16.mxu0 0
    %220 = vmatpush1.bf16.msra.mxu0 0
    %221 = vmatprep.subr.bf16.mxu0 0
    %222 = vmatpush1.bf16.msra.mxu0 0
    %223 = vmatprep.subr.bf16.mxu0 0
    %224 = vmatpush1.bf16.msra.mxu0 0
    %225 = vmatprep.subr.bf16.mxu0 0
    %226 = vmatpush1.bf16.msra.mxu0 0
    %227 = vmatprep.subr.bf16.mxu0 0
    %228 = vmatpush1.bf16.msra.mxu0 0
    %229 = vmatprep.subr.bf16.mxu0 0
    %230 = vmatpush1.bf16.msra.mxu0 0
    %231 = vmatprep.mubr.bf16.mxu0 0
    %232 = vmatmul.mubr.bf16.gmra.mrb[0].mxu0 %v197
    %v233 = vpop.f32.mrb[0].mxu0
    %v234 = vadd.f32 %v138, %v233
    %v235 = vpop.f32.mrb[0].mxu0
    %v236 = vadd.f32 %v142, %v235
    %v237 = vpop.f32.mrb[0].mxu0
    %v238 = vadd.f32 %v138, %v237
    %v239 = vpop.f32.mrb[0].mxu0
    %v240 = vadd.f32 %v142, %v239
    %241 = vdwg.mxu0
    %242 = vmatprep.subr.bf16.mxu0 %v182
    %243 = vmatpush1.bf16.msra.mxu0 %v181
    %244 = vmatprep.subr.bf16.mxu0 %v186
    %245 = vmatpush1.bf16.msra.mxu0 %v185
    %246 = vmatprep.subr.bf16.mxu0 0
    %247 = vmatpush1.bf16.msra.mxu0 0
    %248 = vmatprep.subr.bf16.mxu0 0
    %249 = vmatpush1.bf16.msra.mxu0 0
    %250 = vmatprep.subr.bf16.mxu0 0
    %251 = vmatpush1.bf16.msra.mxu0 0
    %252 = vmatprep.subr.bf16.mxu0 0
    %253 = vmatpush1.bf16.msra.mxu0 0
    %254 = vmatprep.subr.bf16.mxu0 0
    %255 = vmatpush1.bf16.msra.mxu0 0
    %256 = vmatprep.subr.bf16.mxu0 0
    %257 = vmatpush1.bf16.msra.mxu0 0
    %258 = vmatprep.subr.bf16.mxu0 0
    %259 = vmatpush1.bf16.msra.mxu0 0
    %260 = vmatprep.subr.bf16.mxu0 0
    %261 = vmatpush1.bf16.msra.mxu0 0
    %262 = vmatprep.subr.bf16.mxu0 0
    %263 = vmatpush1.bf16.msra.mxu0 0
    %264 = vmatprep.subr.bf16.mxu0 0
    %265 = vmatpush1.bf16.msra.mxu0 0
    %266 = vmatprep.subr.bf16.mxu0 0
    %267 = vmatpush1.bf16.msra.mxu0 0
    %268 = vmatprep.subr.bf16.mxu0 0
    %269 = vmatpush1.bf16.msra.mxu0 0
    %270 = vmatprep.subr.bf16.mxu0 0
    %271 = vmatpush1.bf16.msra.mxu0 0
    %272 = vmatprep.subr.bf16.mxu0 0
    %273 = vmatpush1.bf16.msra.mxu0 0
    %274 = vmatprep.mubr.bf16.mxu0 0
    %275 = vmatmul.mubr.bf16.gmra.mrb[0].mxu0 %v197
    %v276 = vpop.f32.mrb[0].mxu0
    %v277 = vadd.f32 %v146, %v276
    %v278 = vpop.f32.mrb[0].mxu0
    %v279 = vadd.f32 %v150, %v278
    %v280 = vpop.f32.mrb[0].mxu0
    %v281 = vadd.f32 %v146, %v280
    %v282 = vpop.f32.mrb[0].mxu0
    %v283 = vadd.f32 %v150, %v282
    %284 = vdwg.mxu0
    %v285 = vmax.f32 %v234, 0.0
    %v286 = vmax.f32 %v236, 0.0
    %v287 = vmax.f32 %v277, 0.0
    %v288 = vmax.f32 %v279, 0.0
    %v289 = vmax.f32 %v238, 0.0
    %v290 = vmax.f32 %v240, 0.0
    %v291 = vmax.f32 %v281, 0.0
    %v292 = vmax.f32 %v283, 0.0
    %v293 = vpack.c.bf16 %v289, %v285
    %v294 = vpack.c.bf16 %v290, %v286
    %v295 = vpack.c.bf16 %v291, %v287
    %v296 = vpack.c.bf16 %v292, %v288
    %v297 = vld [vmem:[#allocation7] sm:$0xff]
    %v298 = vld [vmem:[#allocation7 + $0x8] sm:$0xff]
    %v299 = vld [vmem:[#allocation7 + $0x10] sm:$0xff]
    %v300 = vld [vmem:[#allocation7 + $0x18] sm:$0xff]
    %v301 = vld [vmem:[#allocation7 + $0x20] sm:$0xff]
    %v302 = vld [vmem:[#allocation7 + $0x28] sm:$0xff]
    %v303 = vld [vmem:[#allocation7 + $0x30] sm:$0xff]
    %v304 = vld [vmem:[#allocation7 + $0x38] sm:$0xff]
    %v305 = vld [vmem:[#allocation7 + $0x40] sm:$0xff]
    %v306 = vld [vmem:[#allocation7 + $0x48] sm:$0xff]
    %v307 = vld [vmem:[#allocation7 + $0x50] sm:$0xff]
    %v308 = vld [vmem:[#allocation7 + $0x58] sm:$0xff]
    %v309 = vld [vmem:[#allocation7 + $0x60] sm:$0xff]
    %v310 = vld [vmem:[#allocation7 + $0x68] sm:$0xff]
    %v311 = vld [vmem:[#allocation7 + $0x70] sm:$0xff]
    %v312 = vld [vmem:[#allocation7 + $0x78] sm:$0xff]
    %v313 = vld [vmem:[#allocation7 + $0x80] sm:$0xff]
    %v314 = vld [vmem:[#allocation7 + $0x88] sm:$0xff]
    %v315 = vld [vmem:[#allocation7 + $0x90] sm:$0xff]
    %v316 = vld [vmem:[#allocation7 + $0x98] sm:$0xff]
    %v317 = vld [vmem:[#allocation7 + $0xa0] sm:$0xff]
    %v318 = vld [vmem:[#allocation7 + $0xa8] sm:$0xff]
    %v319 = vld [vmem:[#allocation7 + $0xb0] sm:$0xff]
    %v320 = vld [vmem:[#allocation7 + $0xb8] sm:$0xff]
    %v321 = vld [vmem:[#allocation7 + $0xc0] sm:$0xff]
    %v322 = vld [vmem:[#allocation7 + $0xc8] sm:$0xff]
    %v323 = vld [vmem:[#allocation7 + $0xd0] sm:$0xff]
    %v324 = vld [vmem:[#allocation7 + $0xd8] sm:$0xff]
    %v325 = vld [vmem:[#allocation7 + $0xe0] sm:$0xff]
    %v326 = vld [vmem:[#allocation7 + $0xe8] sm:$0xff]
    %v327 = vld [vmem:[#allocation7 + $0xf0] sm:$0xff]
    %v328 = vld [vmem:[#allocation7 + $0xf8] sm:$0xff]
    %v329 = vld [vmem:[#allocation7 + $0x100] sm:$0xff]
    %v330 = vld [vmem:[#allocation7 + $0x108] sm:$0xff]
    %v331 = vld [vmem:[#allocation7 + $0x110] sm:$0xff]
    %v332 = vld [vmem:[#allocation7 + $0x118] sm:$0xff]
    %v333 = vld [vmem:[#allocation7 + $0x120] sm:$0xff]
    %v334 = vld [vmem:[#allocation7 + $0x128] sm:$0xff]
    %v335 = vld [vmem:[#allocation7 + $0x130] sm:$0xff]
    %v336 = vld [vmem:[#allocation7 + $0x138] sm:$0xff]
    %v337 = vld [vmem:[#allocation7 + $0x140] sm:$0xff]
    %v338 = vld [vmem:[#allocation7 + $0x148] sm:$0xff]
    %v339 = vld [vmem:[#allocation7 + $0x150] sm:$0xff]
    %v340 = vld [vmem:[#allocation7 + $0x158] sm:$0xff]
    %v341 = vld [vmem:[#allocation7 + $0x160] sm:$0xff]
    %v342 = vld [vmem:[#allocation7 + $0x168] sm:$0xff]
    %v343 = vld [vmem:[#allocation7 + $0x170] sm:$0xff]
    %v344 = vld [vmem:[#allocation7 + $0x178] sm:$0xff]
    %v345 = vld [vmem:[#allocation7 + $0x180] sm:$0xff]
    %v346 = vld [vmem:[#allocation7 + $0x188] sm:$0xff]
    %v347 = vld [vmem:[#allocation7 + $0x190] sm:$0xff]
    %v348 = vld [vmem:[#allocation7 + $0x198] sm:$0xff]
    %v349 = vld [vmem:[#allocation7 + $0x1a0] sm:$0xff]
    %v350 = vld [vmem:[#allocation7 + $0x1a8] sm:$0xff]
    %v351 = vld [vmem:[#allocation7 + $0x1b0] sm:$0xff]
    %v352 = vld [vmem:[#allocation7 + $0x1b8] sm:$0xff]
    %v353 = vld [vmem:[#allocation7 + $0x1c0] sm:$0xff]
    %v354 = vld [vmem:[#allocation7 + $0x1c8] sm:$0xff]
    %v355 = vld [vmem:[#allocation7 + $0x1d0] sm:$0xff]
    %v356 = vld [vmem:[#allocation7 + $0x1d8] sm:$0xff]
    %v357 = vld [vmem:[#allocation7 + $0x1e0] sm:$0xff]
    %v358 = vld [vmem:[#allocation7 + $0x1e8] sm:$0xff]
    %v359 = vld [vmem:[#allocation7 + $0x1f0] sm:$0xff]
    %v360 = vld [vmem:[#allocation7 + $0x1f8] sm:$0xff]
    %v361 = vld [vmem:[%s4] sm:$0x3]
    %v363 = vlaneseq
    %v364 = vshrl.u32 %v363, 7
    %v365 = vsub.s32 0, %v364
    %v366 = vrot.slane %v361, %v365
    %v367 = vlaneseq
    %v368 = vshrl.u32 %v367, 7
    %v369 = vsub.s32 1, %v368
    %v370 = vrot.slane %v361, %v369
    %v437 = vunpack.c.l.b16 %v297
    %v438 = vunpack.c.h.b16 %v297
    %v439 = vunpack.c.l.b16 %v298
    %v440 = vunpack.c.h.b16 %v298
    %v441 = vunpack.c.l.b16 %v299
    %v442 = vunpack.c.h.b16 %v299
    %v443 = vunpack.c.l.b16 %v300
    %v444 = vunpack.c.h.b16 %v300
    %v445 = vunpack.c.l.b16 %v301
    %v446 = vunpack.c.h.b16 %v301
    %v447 = vunpack.c.l.b16 %v302
    %v448 = vunpack.c.h.b16 %v302
    %v449 = vunpack.c.l.b16 %v303
    %v450 = vunpack.c.h.b16 %v303
    %v451 = vunpack.c.l.b16 %v304
    %v452 = vunpack.c.h.b16 %v304
    %v453 = vunpack.c.l.b16 %v305
    %v454 = vunpack.c.h.b16 %v305
    %v455 = vunpack.c.l.b16 %v306
    %v456 = vunpack.c.h.b16 %v306
    %v457 = vunpack.c.l.b16 %v307
    %v458 = vunpack.c.h.b16 %v307
    %v459 = vunpack.c.l.b16 %v308
    %v460 = vunpack.c.h.b16 %v308
    %v461 = vunpack.c.l.b16 %v309
    %v462 = vunpack.c.h.b16 %v309
    %v463 = vunpack.c.l.b16 %v310
    %v464 = vunpack.c.h.b16 %v310
    %v465 = vunpack.c.l.b16 %v311
    %v466 = vunpack.c.h.b16 %v311
    %v467 = vunpack.c.l.b16 %v312
    %v468 = vunpack.c.h.b16 %v312
    %v469 = vunpack.c.l.b16 %v313
    %v470 = vunpack.c.h.b16 %v313
    %v471 = vunpack.c.l.b16 %v314
    %v472 = vunpack.c.h.b16 %v314
    %v473 = vunpack.c.l.b16 %v315
    %v474 = vunpack.c.h.b16 %v315
    %v475 = vunpack.c.l.b16 %v316
    %v476 = vunpack.c.h.b16 %v316
    %v477 = vunpack.c.l.b16 %v317
    %v478 = vunpack.c.h.b16 %v317
    %v479 = vunpack.c.l.b16 %v318
    %v480 = vunpack.c.h.b16 %v318
    %v481 = vunpack.c.l.b16 %v319
    %v482 = vunpack.c.h.b16 %v319
    %v483 = vunpack.c.l.b16 %v320
    %v484 = vunpack.c.h.b16 %v320
    %v485 = vunpack.c.l.b16 %v321
    %v486 = vunpack.c.h.b16 %v321
    %v487 = vunpack.c.l.b16 %v322
    %v488 = vunpack.c.h.b16 %v322
    %v489 = vunpack.c.l.b16 %v323
    %v490 = vunpack.c.h.b16 %v323
    %v491 = vunpack.c.l.b16 %v324
    %v492 = vunpack.c.h.b16 %v324
    %v493 = vunpack.c.l.b16 %v325
    %v494 = vunpack.c.h.b16 %v325
    %v495 = vunpack.c.l.b16 %v326
    %v496 = vunpack.c.h.b16 %v326
    %v497 = vunpack.c.l.b16 %v327
    %v498 = vunpack.c.h.b16 %v327
    %v499 = vunpack.c.l.b16 %v328
    %v500 = vunpack.c.h.b16 %v328
    %v501 = vunpack.c.l.b16 %v329
    %v502 = vunpack.c.h.b16 %v329
    %v503 = vunpack.c.l.b16 %v330
    %v504 = vunpack.c.h.b16 %v330
    %v505 = vunpack.c.l.b16 %v331
    %v506 = vunpack.c.h.b16 %v331
    %v507 = vunpack.c.l.b16 %v332
    %v508 = vunpack.c.h.b16 %v332
    %v509 = vunpack.c.l.b16 %v333
    %v510 = vunpack.c.h.b16 %v333
    %v511 = vunpack.c.l.b16 %v334
    %v512 = vunpack.c.h.b16 %v334
    %v513 = vunpack.c.l.b16 %v335
    %v514 = vunpack.c.h.b16 %v335
    %v515 = vunpack.c.l.b16 %v336
    %v516 = vunpack.c.h.b16 %v336
    %v517 = vunpack.c.l.b16 %v337
    %v518 = vunpack.c.h.b16 %v337
    %v519 = vunpack.c.l.b16 %v338
    %v520 = vunpack.c.h.b16 %v338
    %v521 = vunpack.c.l.b16 %v339
    %v522 = vunpack.c.h.b16 %v339
    %v523 = vunpack.c.l.b16 %v340
    %v524 = vunpack.c.h.b16 %v340
    %v525 = vunpack.c.l.b16 %v341
    %v526 = vunpack.c.h.b16 %v341
    %v527 = vunpack.c.l.b16 %v342
    %v528 = vunpack.c.h.b16 %v342
    %v529 = vunpack.c.l.b16 %v343
    %v530 = vunpack.c.h.b16 %v343
    %v531 = vunpack.c.l.b16 %v344
    %v532 = vunpack.c.h.b16 %v344
    %v533 = vunpack.c.l.b16 %v345
    %v534 = vunpack.c.h.b16 %v345
    %v535 = vunpack.c.l.b16 %v346
    %v536 = vunpack.c.h.b16 %v346
    %v537 = vunpack.c.l.b16 %v347
    %v538 = vunpack.c.h.b16 %v347
    %v539 = vunpack.c.l.b16 %v348
    %v540 = vunpack.c.h.b16 %v348
    %v541 = vunpack.c.l.b16 %v349
    %v542 = vunpack.c.h.b16 %v349
    %v543 = vunpack.c.l.b16 %v350
    %v544 = vunpack.c.h.b16 %v350
    %v545 = vunpack.c.l.b16 %v351
    %v546 = vunpack.c.h.b16 %v351
    %v547 = vunpack.c.l.b16 %v352
    %v548 = vunpack.c.h.b16 %v352
    %v549 = vunpack.c.l.b16 %v353
    %v550 = vunpack.c.h.b16 %v353
    %v551 = vunpack.c.l.b16 %v354
    %v552 = vunpack.c.h.b16 %v354
    %v553 = vunpack.c.l.b16 %v355
    %v554 = vunpack.c.h.b16 %v355
    %v555 = vunpack.c.l.b16 %v356
    %v556 = vunpack.c.h.b16 %v356
    %v557 = vunpack.c.l.b16 %v357
    %v558 = vunpack.c.h.b16 %v357
    %v559 = vunpack.c.l.b16 %v358
    %v560 = vunpack.c.h.b16 %v358
    %v561 = vunpack.c.l.b16 %v359
    %v562 = vunpack.c.h.b16 %v359
    %v563 = vunpack.c.l.b16 %v360
    %v564 = vunpack.c.h.b16 %v360
    %v565 = vpack.c.b16 %v439, %v437
    %v566 = vpack.c.b16 %v440, %v438
    %v567 = vpack.c.b16 %v443, %v441
    %v568 = vpack.c.b16 %v444, %v442
    %v569 = vpack.c.b16 %v447, %v445
    %v570 = vpack.c.b16 %v448, %v446
    %v571 = vpack.c.b16 %v451, %v449
    %v572 = vpack.c.b16 %v452, %v450
    %v573 = vpack.c.b16 %v455, %v453
    %v574 = vpack.c.b16 %v456, %v454
    %v575 = vpack.c.b16 %v459, %v457
    %v576 = vpack.c.b16 %v460, %v458
    %v577 = vpack.c.b16 %v463, %v461
    %v578 = vpack.c.b16 %v464, %v462
    %v579 = vpack.c.b16 %v467, %v465
    %v580 = vpack.c.b16 %v468, %v466
    %v581 = vpack.c.b16 %v471, %v469
    %v582 = vpack.c.b16 %v472, %v470
    %v583 = vpack.c.b16 %v475, %v473
    %v584 = vpack.c.b16 %v476, %v474
    %v585 = vpack.c.b16 %v479, %v477
    %v586 = vpack.c.b16 %v480, %v478
    %v587 = vpack.c.b16 %v483, %v481
    %v588 = vpack.c.b16 %v484, %v482
    %v589 = vpack.c.b16 %v487, %v485
    %v590 = vpack.c.b16 %v488, %v486
    %v591 = vpack.c.b16 %v491, %v489
    %v592 = vpack.c.b16 %v492, %v490
    %v593 = vpack.c.b16 %v495, %v493
    %v594 = vpack.c.b16 %v496, %v494
    %v595 = vpack.c.b16 %v499, %v497
    %v596 = vpack.c.b16 %v500, %v498
    %v597 = vpack.c.b16 %v503, %v501
    %v598 = vpack.c.b16 %v504, %v502
    %v599 = vpack.c.b16 %v507, %v505
    %v600 = vpack.c.b16 %v508, %v506
    %v601 = vpack.c.b16 %v511, %v509
    %v602 = vpack.c.b16 %v512, %v510
    %v603 = vpack.c.b16 %v515, %v513
    %v604 = vpack.c.b16 %v516, %v514
    %v605 = vpack.c.b16 %v519, %v517
    %v606 = vpack.c.b16 %v520, %v518
    %v607 = vpack.c.b16 %v523, %v521
    %v608 = vpack.c.b16 %v524, %v522
    %v609 = vpack.c.b16 %v527, %v525
    %v610 = vpack.c.b16 %v528, %v526
    %v611 = vpack.c.b16 %v531, %v529
    %v612 = vpack.c.b16 %v532, %v530
    %v613 = vpack.c.b16 %v535, %v533
    %v614 = vpack.c.b16 %v536, %v534
    %v615 = vpack.c.b16 %v539, %v537
    %v616 = vpack.c.b16 %v540, %v538
    %v617 = vpack.c.b16 %v543, %v541
    %v618 = vpack.c.b16 %v544, %v542
    %v619 = vpack.c.b16 %v547, %v545
    %v620 = vpack.c.b16 %v548, %v546
    %v621 = vpack.c.b16 %v551, %v549
    %v622 = vpack.c.b16 %v552, %v550
    %v623 = vpack.c.b16 %v555, %v553
    %v624 = vpack.c.b16 %v556, %v554
    %v625 = vpack.c.b16 %v559, %v557
    %v626 = vpack.c.b16 %v560, %v558
    %v627 = vpack.c.b16 %v563, %v561
    %v628 = vpack.c.b16 %v564, %v562
    %693 = vmatprep.subr.bf16.mxu0 %v566
    %694 = vmatpush1.bf16.msra.mxu0 %v565
    %695 = vmatprep.subr.bf16.mxu0 %v568
    %696 = vmatpush1.bf16.msra.mxu0 %v567
    %697 = vmatprep.subr.bf16.mxu0 %v570
    %698 = vmatpush1.bf16.msra.mxu0 %v569
    %699 = vmatprep.subr.bf16.mxu0 %v572
    %700 = vmatpush1.bf16.msra.mxu0 %v571
    %701 = vmatprep.subr.bf16.mxu0 %v574
    %702 = vmatpush1.bf16.msra.mxu0 %v573
    %703 = vmatprep.subr.bf16.mxu0 %v576
    %704 = vmatpush1.bf16.msra.mxu0 %v575
    %705 = vmatprep.subr.bf16.mxu0 %v578
    %706 = vmatpush1.bf16.msra.mxu0 %v577
    %707 = vmatprep.subr.bf16.mxu0 %v580
    %708 = vmatpush1.bf16.msra.mxu0 %v579
    %709 = vmatprep.subr.bf16.mxu0 %v582
    %710 = vmatpush1.bf16.msra.mxu0 %v581
    %711 = vmatprep.subr.bf16.mxu0 %v584
    %712 = vmatpush1.bf16.msra.mxu0 %v583
    %713 = vmatprep.subr.bf16.mxu0 %v586
    %714 = vmatpush1.bf16.msra.mxu0 %v585
    %715 = vmatprep.subr.bf16.mxu0 %v588
    %716 = vmatpush1.bf16.msra.mxu0 %v587
    %717 = vmatprep.subr.bf16.mxu0 %v590
    %718 = vmatpush1.bf16.msra.mxu0 %v589
    %719 = vmatprep.subr.bf16.mxu0 %v592
    %720 = vmatpush1.bf16.msra.mxu0 %v591
    %721 = vmatprep.subr.bf16.mxu0 %v594
    %722 = vmatpush1.bf16.msra.mxu0 %v593
    %723 = vmatprep.subr.bf16.mxu0 %v596
    %724 = vmatpush1.bf16.msra.mxu0 %v595
    %725 = vmatprep.mubr.bf16.mxu0 %v294
    %726 = vmatmul.mubr.bf16.gmra.mrb[0].mxu0 %v293
    %v727 = vpop.f32.mrb[0].mxu0
    %v728 = vadd.f32 %v366, %v727
    %v729 = vpop.f32.mrb[0].mxu0
    %v730 = vadd.f32 %v370, %v729
    %v731 = vpop.f32.mrb[0].mxu0
    %v732 = vadd.f32 %v366, %v731
    %v733 = vpop.f32.mrb[0].mxu0
    %v734 = vadd.f32 %v370, %v733
    %735 = vdwg.mxu0
    %736 = vmatprep.subr.bf16.mxu0 %v598
    %737 = vmatpush1.bf16.msra.mxu0 %v597
    %738 = vmatprep.subr.bf16.mxu0 %v600
    %739 = vmatpush1.bf16.msra.mxu0 %v599
    %740 = vmatprep.subr.bf16.mxu0 %v602
    %741 = vmatpush1.bf16.msra.mxu0 %v601
    %742 = vmatprep.subr.bf16.mxu0 %v604
    %743 = vmatpush1.bf16.msra.mxu0 %v603
    %744 = vmatprep.subr.bf16.mxu0 %v606
    %745 = vmatpush1.bf16.msra.mxu0 %v605
    %746 = vmatprep.subr.bf16.mxu0 %v608
    %747 = vmatpush1.bf16.msra.mxu0 %v607
    %748 = vmatprep.subr.bf16.mxu0 %v610
    %749 = vmatpush1.bf16.msra.mxu0 %v609
    %750 = vmatprep.subr.bf16.mxu0 %v612
    %751 = vmatpush1.bf16.msra.mxu0 %v611
    %752 = vmatprep.subr.bf16.mxu0 %v614
    %753 = vmatpush1.bf16.msra.mxu0 %v613
    %754 = vmatprep.subr.bf16.mxu0 %v616
    %755 = vmatpush1.bf16.msra.mxu0 %v615
    %756 = vmatprep.subr.bf16.mxu0 %v618
    %757 = vmatpush1.bf16.msra.mxu0 %v617
    %758 = vmatprep.subr.bf16.mxu0 %v620
    %759 = vmatpush1.bf16.msra.mxu0 %v619
    %760 = vmatprep.subr.bf16.mxu0 %v622
    %761 = vmatpush1.bf16.msra.mxu0 %v621
    %762 = vmatprep.subr.bf16.mxu0 %v624
    %763 = vmatpush1.bf16.msra.mxu0 %v623
    %764 = vmatprep.subr.bf16.mxu0 %v626
    %765 = vmatpush1.bf16.msra.mxu0 %v625
    %766 = vmatprep.subr.bf16.mxu0 %v628
    %767 = vmatpush1.bf16.msra.mxu0 %v627
    %768 = vmatprep.mubr.bf16.mxu0 %v296
    %769 = vmatmul.mubr.bf16.gmra.mrb[0].mxu0 %v295
    %v770 = vpop.f32.mrb[0].mxu0
    %v771 = vadd.f32 %v728, %v770
    %v772 = vpop.f32.mrb[0].mxu0
    %v773 = vadd.f32 %v730, %v772
    %v774 = vpop.f32.mrb[0].mxu0
    %v775 = vadd.f32 %v732, %v774
    %v776 = vpop.f32.mrb[0].mxu0
    %v777 = vadd.f32 %v734, %v776
    %778 = vdwg.mxu0
    %v779 = vmax.f32 %v771, 0.0
    %v780 = vmax.f32 %v773, 0.0
    %v781 = vmax.f32 %v775, 0.0
    %v782 = vmax.f32 %v777, 0.0
    %v783 = vpack.c.bf16 %v781, %v779
    %v784 = vpack.c.bf16 %v782, %v780
    %v785 = vld [vmem:[#allocation8] sm:$0xf]
    %v786 = vld [vmem:[#allocation8 + $0x4] sm:$0xf]
    %v787 = vld [vmem:[#allocation8 + $0x8] sm:$0xf]
    %v788 = vld [vmem:[#allocation8 + $0xc] sm:$0xf]
    %v789 = vld [vmem:[#allocation8 + $0x10] sm:$0xf]
    %v790 = vld [vmem:[#allocation8 + $0x14] sm:$0xf]
    %v791 = vld [vmem:[#allocation8 + $0x18] sm:$0xf]
    %v792 = vld [vmem:[#allocation8 + $0x1c] sm:$0xf]
    %v793 = vld [vmem:[#allocation8 + $0x20] sm:$0xf]
    %v794 = vld [vmem:[#allocation8 + $0x24] sm:$0xf]
    %v795 = vld [vmem:[#allocation8 + $0x28] sm:$0xf]
    %v796 = vld [vmem:[#allocation8 + $0x2c] sm:$0xf]
    %v797 = vld [vmem:[#allocation8 + $0x30] sm:$0xf]
    %v798 = vld [vmem:[#allocation8 + $0x34] sm:$0xf]
    %v799 = vld [vmem:[#allocation8 + $0x38] sm:$0xf]
    %v800 = vld [vmem:[#allocation8 + $0x3c] sm:$0xf]
    %v801 = vld [vmem:[#allocation8 + $0x40] sm:$0xf]
    %v802 = vld [vmem:[#allocation8 + $0x44] sm:$0xf]
    %v803 = vld [vmem:[#allocation8 + $0x48] sm:$0xf]
    %v804 = vld [vmem:[#allocation8 + $0x4c] sm:$0xf]
    %v805 = vld [vmem:[#allocation8 + $0x50] sm:$0xf]
    %v806 = vld [vmem:[#allocation8 + $0x54] sm:$0xf]
    %v807 = vld [vmem:[#allocation8 + $0x58] sm:$0xf]
    %v808 = vld [vmem:[#allocation8 + $0x5c] sm:$0xf]
    %v809 = vld [vmem:[#allocation8 + $0x60] sm:$0xf]
    %v810 = vld [vmem:[#allocation8 + $0x64] sm:$0xf]
    %v811 = vld [vmem:[#allocation8 + $0x68] sm:$0xf]
    %v812 = vld [vmem:[#allocation8 + $0x6c] sm:$0xf]
    %v813 = vld [vmem:[#allocation8 + $0x70] sm:$0xf]
    %v814 = vld [vmem:[#allocation8 + $0x74] sm:$0xf]
    %v815 = vld [vmem:[#allocation8 + $0x78] sm:$0xf]
    %v816 = vld [vmem:[#allocation8 + $0x7c] sm:$0xf]
    %v817 = vld [vmem:[%s6] sm:$0x1]
    %v819 = vlaneseq
    %v820 = vshrl.u32 %v819, 7
    %v821 = vsub.s32 0, %v820
    %v822 = vrot.slane %v817, %v821
    %v856 = vunpack.c.l.b16 %v785
    %v857 = vunpack.c.l.b16 %v786
    %v858 = vunpack.c.l.b16 %v787
    %v859 = vunpack.c.l.b16 %v788
    %v860 = vunpack.c.l.b16 %v789
    %v861 = vunpack.c.l.b16 %v790
    %v862 = vunpack.c.l.b16 %v791
    %v863 = vunpack.c.l.b16 %v792
    %v864 = vunpack.c.l.b16 %v793
    %v865 = vunpack.c.l.b16 %v794
    %v866 = vunpack.c.l.b16 %v795
    %v867 = vunpack.c.l.b16 %v796
    %v868 = vunpack.c.l.b16 %v797
    %v869 = vunpack.c.l.b16 %v798
    %v870 = vunpack.c.l.b16 %v799
    %v871 = vunpack.c.l.b16 %v800
    %v872 = vunpack.c.l.b16 %v801
    %v873 = vunpack.c.l.b16 %v802
    %v874 = vunpack.c.l.b16 %v803
    %v875 = vunpack.c.l.b16 %v804
    %v876 = vunpack.c.l.b16 %v805
    %v877 = vunpack.c.l.b16 %v806
    %v878 = vunpack.c.l.b16 %v807
    %v879 = vunpack.c.l.b16 %v808
    %v880 = vunpack.c.l.b16 %v809
    %v881 = vunpack.c.l.b16 %v810
    %v882 = vunpack.c.l.b16 %v811
    %v883 = vunpack.c.l.b16 %v812
    %v884 = vunpack.c.l.b16 %v813
    %v885 = vunpack.c.l.b16 %v814
    %v886 = vunpack.c.l.b16 %v815
    %v887 = vunpack.c.l.b16 %v816
    %v888 = vpack.c.b16 %v857, %v856
    %v889 = vpack.c.b16 %v859, %v858
    %v890 = vpack.c.b16 %v861, %v860
    %v891 = vpack.c.b16 %v863, %v862
    %v892 = vpack.c.b16 %v865, %v864
    %v893 = vpack.c.b16 %v867, %v866
    %v894 = vpack.c.b16 %v869, %v868
    %v895 = vpack.c.b16 %v871, %v870
    %v896 = vpack.c.b16 %v873, %v872
    %v897 = vpack.c.b16 %v875, %v874
    %v898 = vpack.c.b16 %v877, %v876
    %v899 = vpack.c.b16 %v879, %v878
    %v900 = vpack.c.b16 %v881, %v880
    %v901 = vpack.c.b16 %v883, %v882
    %v902 = vpack.c.b16 %v885, %v884
    %v903 = vpack.c.b16 %v887, %v886
    %920 = vmatprep.subr.bf16.mxu0 0
    %921 = vmatpush1.bf16.msra.mxu0 %v888
    %922 = vmatprep.subr.bf16.mxu0 0
    %923 = vmatpush1.bf16.msra.mxu0 %v889
    %924 = vmatprep.subr.bf16.mxu0 0
    %925 = vmatpush1.bf16.msra.mxu0 %v890
    %926 = vmatprep.subr.bf16.mxu0 0
    %927 = vmatpush1.bf16.msra.mxu0 %v891
    %928 = vmatprep.subr.bf16.mxu0 0
    %929 = vmatpush1.bf16.msra.mxu0 %v892
    %930 = vmatprep.subr.bf16.mxu0 0
    %931 = vmatpush1.bf16.msra.mxu0 %v893
    %932 = vmatprep.subr.bf16.mxu0 0
    %933 = vmatpush1.bf16.msra.mxu0 %v894
    %934 = vmatprep.subr.bf16.mxu0 0
    %935 = vmatpush1.bf16.msra.mxu0 %v895
    %936 = vmatprep.subr.bf16.mxu0 0
    %937 = vmatpush1.bf16.msra.mxu0 %v896
    %938 = vmatprep.subr.bf16.mxu0 0
    %939 = vmatpush1.bf16.msra.mxu0 %v897
    %940 = vmatprep.subr.bf16.mxu0 0
    %941 = vmatpush1.bf16.msra.mxu0 %v898
    %942 = vmatprep.subr.bf16.mxu0 0
    %943 = vmatpush1.bf16.msra.mxu0 %v899
    %944 = vmatprep.subr.bf16.mxu0 0
    %945 = vmatpush1.bf16.msra.mxu0 %v900
    %946 = vmatprep.subr.bf16.mxu0 0
    %947 = vmatpush1.bf16.msra.mxu0 %v901
    %948 = vmatprep.subr.bf16.mxu0 0
    %949 = vmatpush1.bf16.msra.mxu0 %v902
    %950 = vmatprep.subr.bf16.mxu0 0
    %951 = vmatpush1.bf16.msra.mxu0 %v903
    %952 = vmatprep.mubr.bf16.mxu0 %v784
    %953 = vmatmul.mubr.bf16.gmra.mrb[0].mxu0 %v783
    %v954 = vpop.f32.mrb[0].mxu0
    %v955 = vadd.f32 %v822, %v954
    %v956 = vpop.f32.mrb[0].mxu0
    %v957 = vpop.f32.mrb[0].mxu0
    %v958 = vadd.f32 %v822, %v957
    %v959 = vpop.f32.mrb[0].mxu0
    %960 = vdwg.mxu0
    %v961 = vmax.f32 %v955, 0.0
    %v962 = vmax.f32 %v958, 0.0
    %v963 = vpack.c.bf16 %v962, %v961
    %v964 = vld [vmem:[#allocation10] sm:$0xf]
    %v965 = vld [vmem:[#allocation10 + $0x4] sm:$0xf]
    %v966 = vld [vmem:[#allocation10 + $0x8] sm:$0xf]
    %v967 = vld [vmem:[#allocation10 + $0xc] sm:$0xf]
    %v968 = vld [vmem:[#allocation10 + $0x10] sm:$0xf]
    %v969 = vld [vmem:[#allocation10 + $0x14] sm:$0xf]
    %v970 = vld [vmem:[#allocation10 + $0x18] sm:$0xf]
    %v971 = vld [vmem:[#allocation10 + $0x1c] sm:$0xf]
    %v972 = vld [vmem:[#allocation10 + $0x20] sm:$0xf]
    %v973 = vld [vmem:[#allocation10 + $0x24] sm:$0xf]
    %v974 = vld [vmem:[#allocation10 + $0x28] sm:$0xf]
    %v975 = vld [vmem:[#allocation10 + $0x2c] sm:$0xf]
    %v976 = vld [vmem:[#allocation10 + $0x30] sm:$0xf]
    %v977 = vld [vmem:[#allocation10 + $0x34] sm:$0xf]
    %v978 = vld [vmem:[#allocation10 + $0x38] sm:$0xf]
    %v979 = vld [vmem:[#allocation10 + $0x3c] sm:$0xf]
    %v980 = vld [vmem:[%s8] sm:$0x1]
    %v982 = vlaneseq
    %v983 = vshrl.u32 %v982, 7
    %v984 = vsub.s32 0, %v983
    %v985 = vrot.slane %v980, %v984
    %v1003 = vunpack.c.l.b16 %v964
    %v1004 = vunpack.c.l.b16 %v965
    %v1005 = vunpack.c.l.b16 %v966
    %v1006 = vunpack.c.l.b16 %v967
    %v1007 = vunpack.c.l.b16 %v968
    %v1008 = vunpack.c.l.b16 %v969
    %v1009 = vunpack.c.l.b16 %v970
    %v1010 = vunpack.c.l.b16 %v971
    %v1011 = vunpack.c.l.b16 %v972
    %v1012 = vunpack.c.l.b16 %v973
    %v1013 = vunpack.c.l.b16 %v974
    %v1014 = vunpack.c.l.b16 %v975
    %v1015 = vunpack.c.l.b16 %v976
    %v1016 = vunpack.c.l.b16 %v977
    %v1017 = vunpack.c.l.b16 %v978
    %v1018 = vunpack.c.l.b16 %v979
    %v1019 = vpack.c.b16 %v1004, %v1003
    %v1020 = vpack.c.b16 %v1006, %v1005
    %v1021 = vpack.c.b16 %v1008, %v1007
    %v1022 = vpack.c.b16 %v1010, %v1009
    %v1023 = vpack.c.b16 %v1012, %v1011
    %v1024 = vpack.c.b16 %v1014, %v1013
    %v1025 = vpack.c.b16 %v1016, %v1015
    %v1026 = vpack.c.b16 %v1018, %v1017
    %1035 = vmatprep.subr.bf16.mxu0 0
    %1036 = vmatpush1.bf16.msra.mxu0 %v1019
    %1037 = vmatprep.subr.bf16.mxu0 0
    %1038 = vmatpush1.bf16.msra.mxu0 %v1020
    %1039 = vmatprep.subr.bf16.mxu0 0
    %1040 = vmatpush1.bf16.msra.mxu0 %v1021
    %1041 = vmatprep.subr.bf16.mxu0 0
    %1042 = vmatpush1.bf16.msra.mxu0 %v1022
    %1043 = vmatprep.subr.bf16.mxu0 0
    %1044 = vmatpush1.bf16.msra.mxu0 %v1023
    %1045 = vmatprep.subr.bf16.mxu0 0
    %1046 = vmatpush1.bf16.msra.mxu0 %v1024
    %1047 = vmatprep.subr.bf16.mxu0 0
    %1048 = vmatpush1.bf16.msra.mxu0 %v1025
    %1049 = vmatprep.subr.bf16.mxu0 0
    %1050 = vmatpush1.bf16.msra.mxu0 %v1026
    %1051 = vmatprep.subr.bf16.mxu0 0
    %1052 = vmatpush1.bf16.msra.mxu0 0
    %1053 = vmatprep.subr.bf16.mxu0 0
    %1054 = vmatpush1.bf16.msra.mxu0 0
    %1055 = vmatprep.subr.bf16.mxu0 0
    %1056 = vmatpush1.bf16.msra.mxu0 0
    %1057 = vmatprep.subr.bf16.mxu0 0
    %1058 = vmatpush1.bf16.msra.mxu0 0
    %1059 = vmatprep.subr.bf16.mxu0 0
    %1060 = vmatpush1.bf16.msra.mxu0 0
    %1061 = vmatprep.subr.bf16.mxu0 0
    %1062 = vmatpush1.bf16.msra.mxu0 0
    %1063 = vmatprep.subr.bf16.mxu0 0
    %1064 = vmatpush1.bf16.msra.mxu0 0
    %1065 = vmatprep.subr.bf16.mxu0 0
    %1066 = vmatpush1.bf16.msra.mxu0 0
    %1067 = vmatprep.mubr.bf16.mxu0 0
    %1068 = vmatmul.mubr.bf16.gmra.mrb[0].mxu0 %v963
    %v1069 = vpop.f32.mrb[0].mxu0
    %v1070 = vadd.f32 %v985, %v1069
    %v1071 = vpop.f32.mrb[0].mxu0
    %v1072 = vpop.f32.mrb[0].mxu0
    %v1073 = vadd.f32 %v985, %v1072
    %v1074 = vpop.f32.mrb[0].mxu0
    %1075 = vdwg.mxu0
    %v1076 = vmax.f32 %v1070, 0.0
    %v1077 = vmax.f32 %v1073, 0.0
    %v1078 = vpack.c.bf16 %v1077, %v1076
    %v1079 = vld [vmem:[#allocation11] sm:$0xf]
    %v1080 = vld [vmem:[#allocation11 + $0x4] sm:$0xf]
    %v1081 = vld [vmem:[#allocation11 + $0x8] sm:$0xf]
    %v1082 = vld [vmem:[#allocation11 + $0xc] sm:$0xf]
    %v1083 = vld [vmem:[#allocation11 + $0x10] sm:$0xf]
    %v1084 = vld [vmem:[#allocation11 + $0x14] sm:$0xf]
    %v1085 = vld [vmem:[#allocation11 + $0x18] sm:$0xf]
    %v1086 = vld [vmem:[#allocation11 + $0x1c] sm:$0xf]
    %v1087 = vld [vmem:[#allocation11 + $0x20] sm:$0xf]
    %v1088 = vld [vmem:[#allocation11 + $0x24] sm:$0xf]
    %v1089 = vld [vmem:[#allocation11 + $0x28] sm:$0xf]
    %v1090 = vld [vmem:[#allocation11 + $0x2c] sm:$0xf]
    %v1091 = vld [vmem:[#allocation11 + $0x30] sm:$0xf]
    %v1092 = vld [vmem:[#allocation11 + $0x34] sm:$0xf]
    %v1093 = vld [vmem:[#allocation11 + $0x38] sm:$0xf]
    %v1094 = vld [vmem:[#allocation11 + $0x3c] sm:$0xf]
    %v1095 = vld [vmem:[%s10] sm:$0x1]
    %v1097 = vlaneseq
    %v1098 = vshrl.u32 %v1097, 7
    %v1099 = vsub.s32 0, %v1098
    %v1100 = vrot.slane %v1095, %v1099
    %v1118 = vunpack.c.l.b16 %v1079
    %v1119 = vunpack.c.l.b16 %v1080
    %v1120 = vunpack.c.l.b16 %v1081
    %v1121 = vunpack.c.l.b16 %v1082
    %v1122 = vunpack.c.l.b16 %v1083
    %v1123 = vunpack.c.l.b16 %v1084
    %v1124 = vunpack.c.l.b16 %v1085
    %v1125 = vunpack.c.l.b16 %v1086
    %v1126 = vunpack.c.l.b16 %v1087
    %v1127 = vunpack.c.l.b16 %v1088
    %v1128 = vunpack.c.l.b16 %v1089
    %v1129 = vunpack.c.l.b16 %v1090
    %v1130 = vunpack.c.l.b16 %v1091
    %v1131 = vunpack.c.l.b16 %v1092
    %v1132 = vunpack.c.l.b16 %v1093
    %v1133 = vunpack.c.l.b16 %v1094
    %v1134 = vpack.c.b16 %v1119, %v1118
    %v1135 = vpack.c.b16 %v1121, %v1120
    %v1136 = vpack.c.b16 %v1123, %v1122
    %v1137 = vpack.c.b16 %v1125, %v1124
    %v1138 = vpack.c.b16 %v1127, %v1126
    %v1139 = vpack.c.b16 %v1129, %v1128
    %v1140 = vpack.c.b16 %v1131, %v1130
    %v1141 = vpack.c.b16 %v1133, %v1132
    %1150 = vmatprep.subr.bf16.mxu0 0
    %1151 = vmatpush1.bf16.msra.mxu0 %v1134
    %1152 = vmatprep.subr.bf16.mxu0 0
    %1153 = vmatpush1.bf16.msra.mxu0 %v1135
    %1154 = vmatprep.subr.bf16.mxu0 0
    %1155 = vmatpush1.bf16.msra.mxu0 %v1136
    %1156 = vmatprep.subr.bf16.mxu0 0
    %1157 = vmatpush1.bf16.msra.mxu0 %v1137
    %1158 = vmatprep.subr.bf16.mxu0 0
    %1159 = vmatpush1.bf16.msra.mxu0 %v1138
    %1160 = vmatprep.subr.bf16.mxu0 0
    %1161 = vmatpush1.bf16.msra.mxu0 %v1139
    %1162 = vmatprep.subr.bf16.mxu0 0
    %1163 = vmatpush1.bf16.msra.mxu0 %v1140
    %1164 = vmatprep.subr.bf16.mxu0 0
    %1165 = vmatpush1.bf16.msra.mxu0 %v1141
    %1166 = vmatprep.subr.bf16.mxu0 0
    %1167 = vmatpush1.bf16.msra.mxu0 0
    %1168 = vmatprep.subr.bf16.mxu0 0
    %1169 = vmatpush1.bf16.msra.mxu0 0
    %1170 = vmatprep.subr.bf16.mxu0 0
    %1171 = vmatpush1.bf16.msra.mxu0 0
    %1172 = vmatprep.subr.bf16.mxu0 0
    %1173 = vmatpush1.bf16.msra.mxu0 0
    %1174 = vmatprep.subr.bf16.mxu0 0
    %1175 = vmatpush1.bf16.msra.mxu0 0
    %1176 = vmatprep.subr.bf16.mxu0 0
    %1177 = vmatpush1.bf16.msra.mxu0 0
    %1178 = vmatprep.subr.bf16.mxu0 0
    %1179 = vmatpush1.bf16.msra.mxu0 0
    %1180 = vmatprep.subr.bf16.mxu0 0
    %1181 = vmatpush1.bf16.msra.mxu0 0
    %1182 = vmatprep.mubr.bf16.mxu0 0
    %1183 = vmatmul.mubr.bf16.gmra.mrb[0].mxu0 %v1078
    %v1184 = vpop.f32.mrb[0].mxu0
    %v1185 = vadd.f32 %v1100, %v1184
    %v1186 = vpop.f32.mrb[0].mxu0
    %v1187 = vpop.f32.mrb[0].mxu0
    %v1188 = vadd.f32 %v1100, %v1187
    %v1189 = vpop.f32.mrb[0].mxu0
    %1190 = vdwg.mxu0
    %1191 = vst [vmem:[#allocation13] sm:$0xff] %v1185
    %1192 = vst [vmem:[#allocation13 + $0x8] sm:$0xff] %v1188
    // Predicated region
    $region70: #{tpu_custom_call.1} parent=1 // pred_check
      _
    $region71: #{tpu_custom_call.1} parent=1 // pred_check_branch
      %1194 = sbr.rel (0) target = $region73
    $region72: #{tpu_custom_call.1} parent=1 // pred_region
      %s1196 = ssub.s32 256, 256
      %1197 = vsyncadd [#allocation4], %s1196
      %s1198 = sshll.u32 [#allocation13], 4
      %s1199 = int_to_ptr.vmem [resolvable:$true] %s1198
      %1204 = dma.vmem_to_hbm [thread:$0]  %s1199, 256, %s11, [#allocation4], 128, 128, 8
    $region73: #{tpu_custom_call.1} parent=1 // pred_fallthru
      _
    // Predicated region
    $region74: #{tpu_custom_call.1} parent=1 // pred_check
      _
    $region75: #{tpu_custom_call.1} parent=1 // pred_check_branch
      %1206 = sbr.rel (0) target = $region77
    $region76: #{tpu_custom_call.1} parent=1 // pred_region
      %1207 = dma.done [#allocation4], 256
    $region77: #{tpu_custom_call.1} parent=1 // pred_fallthru
      _
    %1208 = vsyncpa [#allocation3], 1
    %1209 = vsyncpa [#allocation6], 1
    %1210 = vsyncpa [#allocation9], 1
    %1211 = vsyncpa [#allocation12], 1
    %1212 = vsyncpa [#allocation4], 1

</llo_original>
